<compile_context>
chip_gen: v6e
topology: v6e:2x2x1
jax: 0.10.0
libtpu: 0.0.40
codegen_flags: <defaults>
</compile_context>

<pallas_src>
import functools

import jax
import jax.numpy as jnp
import numpy as np
from jax.experimental import pallas as pl
from jax.experimental.pallas import tpu as pltpu


# ----------------------------------------------------------------------------
# helpers
# ----------------------------------------------------------------------------
def _round_up(a: int, b: int) -> int:
  return (a + b - 1) // b * b


def _pick_tm(n_pad: int) -> int:
  """Row-tile so 3 adj x 2 buffers x TM x N bf16 stays ~<= 24 MiB (v7x-safe)."""
  budget = 24 * 1024 * 1024
  tm = budget // (3 * 2 * 2 * n_pad)
  tm = (tm // 128) * 128
  tm = max(128, min(512, tm))
  return min(tm, n_pad)


def _pad2(a, rows, cols, dtype):
  a = jnp.asarray(a, jnp.float32)
  a = jnp.pad(a, ((0, rows - a.shape[0]), (0, cols - a.shape[1])))
  return a.astype(dtype)


# ----------------------------------------------------------------------------
# kernels
# ----------------------------------------------------------------------------
def _proj_kernel(x_ref, w1_ref, sup_ref):
  """support = x @ [W_hid | W_ah | W_ahh | 0]   (bf16 in, f32 acc, bf16 out)."""
  sup = jnp.dot(x_ref[...], w1_ref[...], preferred_element_type=jnp.float32)
  sup_ref[...] = sup.astype(sup_ref.dtype)


def _hidden_kernel(nhid, sup_ref, adj_ref, adj2_ref, adj3_ref, h_ref):
  """h = sum_b mask_b * relu(adj_b @ support)  for one row tile."""
  f32 = jnp.float32
  sup = sup_ref[...]
  width = h_ref.shape[-1]
  lane = jax.lax.broadcasted_iota(jnp.int32, (1, width), 1)

  def branch(a_ref, b):
    r = jnp.maximum(jnp.dot(a_ref[...], sup, preferred_element_type=f32), 0.0)
    m = jnp.where((lane >= b * nhid) & (lane < (b + 1) * nhid), 1.0, 0.0)
    return r * m.astype(f32)

  h = branch(adj_ref, 0) + branch(adj2_ref, 1) + branch(adj3_ref, 2)
  h_ref[...] = h.astype(h_ref.dtype)


def _output_kernel(nhid, nclass, gate_ref, h_ref, adj_ref, adj2_ref, adj3_ref,
                   w2_ref, b0_ref, b1_ref, b2_ref, out_ref):
  """Gated second GraphConv layer + log_softmax for one row tile."""
  f32 = jnp.float32
  h = h_ref[...]
  g = gate_ref[...]                               # (1, 1) f32, broadcasts
  hw = h_ref.shape[-1]
  lane_h = jax.lax.broadcasted_iota(jnp.int32, (1, hw), 1)

  def branch(a_ref, b):
    r = jnp.dot(a_ref[...], h, preferred_element_type=f32)
    m = jnp.where((lane_h >= b * nhid) & (lane_h < (b + 1) * nhid), 1.0, 0.0)
    return r * m.astype(f32)

  u = g * branch(adj_ref, 0) + (1.0 - g) * (branch(adj2_ref, 1) +
                                            branch(adj3_ref, 2))
  bias = g * b0_ref[...] + (1.0 - g) * (b1_ref[...] + b2_ref[...])
  z = jnp.dot(u, w2_ref[...], preferred_element_type=f32) + bias

  # mask out padded class lanes, then lane-dense log_softmax
  cw = out_ref.shape[-1]
  lane_c = jax.lax.broadcasted_iota(jnp.int32, (1, cw), 1)
  z = z + jnp.where(lane_c < nclass, 0.0, -1e30).astype(f32)

  m = jnp.max(z, axis=-1, keepdims=True)
  zz = z - m
  lse = jnp.log(jnp.sum(jnp.exp(zz), axis=-1, keepdims=True))
  out_ref[...] = (zz - lse).astype(out_ref.dtype)


# ----------------------------------------------------------------------------
# wrapper
# ----------------------------------------------------------------------------
@jax.jit
def deepgcn_forward(x, adj, adj2, adj3, params):
  """Fused DeepGCN forward. x: [N, nfeat]; adj*: [N, N]; returns [N, nclass]."""
  n, nfeat = x.shape
  nhid = params["w_hid"].shape[1]
  nclass = params["w_out"].shape[1]

  hid_cat = _round_up(3 * nhid, 128)   # concatenated + padded hidden width
  ncp = _round_up(nclass, 128)         # lane-dense padded class width

  n_pad = _round_up(n, 128)
  tm = _pick_tm(n_pad)
  n_pad = _round_up(n_pad, tm)
  grid = (n_pad // tm,)

  bf16 = jnp.bfloat16
  x_p = _pad2(x, n_pad, nfeat, bf16)
  adj_p = _pad2(adj, n_pad, n_pad, bf16)
  adj2_p = _pad2(adj2, n_pad, n_pad, bf16)
  adj3_p = _pad2(adj3, n_pad, n_pad, bf16)

  # first-layer weights: [W_hid | W_ah | W_ahh] padded to 128 lanes (bf16)
  w1_cat = jnp.concatenate(
      [params["w_hid"], params["w_ah"], params["w_ahh"]], axis=1)
  w1_cat = _pad2(w1_cat, nfeat, hid_cat, bf16)

  # second-layer weights packed into block rows of a [hid_cat, ncp] f32 matrix
  w2_cat = jnp.zeros((hid_cat, ncp), jnp.float32)
  w2_cat = w2_cat.at[0 * nhid:1 * nhid, 0:nclass].set(params["w_out"])
  w2_cat = w2_cat.at[1 * nhid:2 * nhid, 0:nclass].set(params["w_ao"])
  w2_cat = w2_cat.at[2 * nhid:3 * nhid, 0:nclass].set(params["w_aoh"])

  b0 = _pad2(params["b_out"], 1, ncp, jnp.float32)
  b1 = _pad2(params["b_ao"], 1, ncp, jnp.float32)
  b2 = _pad2(params["b_aoh"], 1, ncp, jnp.float32)
  gate_v = params["gate2"].astype(jnp.float32).reshape((1, 1))

  # scoped-VMEM request: streamed adj tiles + resident operands (+slack)
  est = (3 * 2 * tm * n_pad * 2 + 2 * n_pad * hid_cat * 2
         + 2 * tm * ncp * 4 + hid_cat * ncp * 4 + (1 << 20))
  vmem_limit = int(min(48 * 1024 * 1024, max(16 * 1024 * 1024, 3 * est)))
  cparams = pltpu.CompilerParams(dimension_semantics=("parallel",),
                                 vmem_limit_bytes=vmem_limit)

  row = lambda i: (i, 0)   # row-tiled operands
  rep = lambda i: (0, 0)   # fully-resident operands

  # ---- pass 1: support = x @ W1_cat  ------------------------------------
  support = pl.pallas_call(
      _proj_kernel,
      out_shape=jax.ShapeDtypeStruct((n_pad, hid_cat), bf16),
      grid=grid,
      in_specs=[pl.BlockSpec((tm, nfeat), row),
                pl.BlockSpec((nfeat, hid_cat), rep)],
      out_specs=pl.BlockSpec((tm, hid_cat), row),
      compiler_params=cparams,
      cost_estimate=pl.CostEstimate(
          flops=int(2 * n_pad * nfeat * hid_cat),
          transcendentals=0,
          bytes_accessed=int(n_pad * nfeat * 2 + 2 * n_pad * hid_cat * 2)),
  )(x_p, w1_cat)

  # ---- pass 2: h = sum_b mask_b * relu(adj_b @ support) ------------------
  h_cat = pl.pallas_call(
      functools.partial(_hidden_kernel, nhid),
      out_shape=jax.ShapeDtypeStruct((n_pad, hid_cat), bf16),
      grid=grid,
      in_specs=[pl.BlockSpec((n_pad, hid_cat), rep),
                pl.BlockSpec((tm, n_pad), row),
                pl.BlockSpec((tm, n_pad), row),
                pl.BlockSpec((tm, n_pad), row)],
      out_specs=pl.BlockSpec((tm, hid_cat), row),
      compiler_params=cparams,
      cost_estimate=pl.CostEstimate(
          flops=int(2 * 3 * n_pad * n_pad * hid_cat),
          transcendentals=0,
          bytes_accessed=int(3 * n_pad * n_pad * 2 + 2 * n_pad * hid_cat * 2)),
  )(support, adj_p, adj2_p, adj3_p)

  # ---- pass 3: gated output GraphConv + log_softmax ----------------------
  out_pad = pl.pallas_call(
      functools.partial(_output_kernel, nhid, nclass),
      out_shape=jax.ShapeDtypeStruct((n_pad, ncp), jnp.float32),
      grid=grid,
      in_specs=[pl.BlockSpec((1, 1), rep),            # gate
                pl.BlockSpec((n_pad, hid_cat), rep),  # h (resident)
                pl.BlockSpec((tm, n_pad), row),       # adj  (mid)
                pl.BlockSpec((tm, n_pad), row),       # adj2 (low)
                pl.BlockSpec((tm, n_pad), row),       # adj3 (high)
                pl.BlockSpec((hid_cat, ncp), rep),    # W2_cat (f32)
                pl.BlockSpec((1, ncp), rep),          # b_out
                pl.BlockSpec((1, ncp), rep),          # b_ao
                pl.BlockSpec((1, ncp), rep)],         # b_aoh
      out_specs=pl.BlockSpec((tm, ncp), row),
      compiler_params=cparams,
      cost_estimate=pl.CostEstimate(
          flops=int(2 * 3 * n_pad * n_pad * hid_cat
                    + 2 * n_pad * hid_cat * ncp),
          transcendentals=int(n_pad * ncp),
          bytes_accessed=int(3 * n_pad * n_pad * 2 + n_pad * hid_cat * 2
                             + n_pad * ncp * 4)),
  )(gate_v, h_cat, adj_p, adj2_p, adj3_p, w2_cat, b0, b1, b2)

  return out_pad[:n, :nclass]


# ----------------------------------------------------------------------------
# pure-JAX reference (f32, mirrors the PyTorch eval-mode forward)
# ----------------------------------------------------------------------------
def _reference(x, adj, adj2, adj3, p):
  def gcn(a, h, w, b=None):
    o = a @ (h @ w)
    return o if b is None else o + b

  h = jax.nn.relu(gcn(adj, x, p["w_hid"]))
  x_main = gcn(adj, h, p["w_out"], p["b_out"])
  h2 = jax.nn.relu(gcn(adj2, x, p["w_ah"]))
  x2 = gcn(adj2, h2, p["w_ao"], p["b_ao"])
  h3 = jax.nn.relu(gcn(adj3, x, p["w_ahh"]))
  x3 = gcn(adj3, h3, p["w_aoh"], p["b_aoh"])
  g = p["gate2"][0]
  x_final = g * x_main + (1.0 - g) * (x2 + x3)
  return jax.nn.log_softmax(x_final, axis=-1)


if __name__ == "__main__":
  # Small shapes consistent with the module: N graph nodes, nfeat -> nhid -> nclass.
  N, NFEAT, NHID, NCLASS = 64, 32, 32, 8

  key = jax.random.PRNGKey(0)
  keys = jax.random.split(key, 12)

  def glorot(k, shape):
    lim = float(np.sqrt(6.0 / (shape[0] + shape[1])))
    return jax.random.uniform(k, shape, jnp.float32, -lim, lim)

  x = jax.random.normal(keys[0], (N, NFEAT), jnp.float32)

  def make_adj(k):
    a = jax.random.uniform(k, (N, N), jnp.float32)
    a = (a + a.T) * 0.5 + jnp.eye(N, dtype=jnp.float32)
    deg = jnp.sum(a, axis=-1, keepdims=True)
    return a / deg   # row-normalized dense adjacency

  adj = make_adj(keys[1])    # data.mid_adj
  adj2 = make_adj(keys[2])   # data.low_adj
  adj3 = make_adj(keys[3])   # data.high_adj

  params = {
      "w_hid": glorot(keys[4], (NFEAT, NHID)),          # hidden_layers[0], bias=False
      "w_out": glorot(keys[5], (NHID, NCLASS)),         # out_layer
      "b_out": jax.random.normal(keys[6], (1, NCLASS), jnp.float32) * 0.1,
      "w_ah": glorot(keys[7], (NFEAT, NHID)),           # addHid_layer, bias=False
      "w_ao": glorot(keys[8], (NHID, NCLASS)),          # addOut_layer
      "b_ao": jax.random.normal(keys[9], (1, NCLASS), jnp.float32) * 0.1,
      "w_ahh": glorot(keys[10], (NFEAT, NHID)),         # addHid_layer_HIGH, bias=False
      "w_aoh": glorot(keys[11], (NHID, NCLASS)),        # addOut_layer_HIGH
      "b_aoh": jnp.zeros((1, NCLASS), jnp.float32),
      "gate2": jnp.array([1.9], jnp.float32),           # nn.Parameter(torch.tensor([1.9]))
  }

  out = deepgcn_forward(x, adj, adj2, adj3, params)
  out = jax.block_until_ready(out)

  ref = _reference(x, adj, adj2, adj3, params)
  # bf16 matmul operands (x / adjacencies / first-layer weights) introduce
  # ~0.2-0.5% input rounding; accumulation is f32, so relax tolerance vs the
  # pure-f32 reference accordingly.
  np.testing.assert_allclose(np.asarray(out), np.asarray(ref),
                             rtol=3e-2, atol=3e-2)

  print("KERNEL_OK")
</pallas_src>

<mosaic_0001>
module attributes {stable_mosaic.version = 11 : i64} {
  func.func @_proj_kernel(%arg0: i32, %arg1: memref<128x32xbf16, #tpu.memory_space<vmem>>, %arg2: memref<32x128xbf16, #tpu.memory_space<vmem>>, %arg3: memref<128x128xbf16, #tpu.memory_space<vmem>>) attributes {dimension_semantics = [#tpu.dimension_semantics<parallel>], iteration_bounds = array<i64: 1>, scalar_prefetch = 0 : i64, scratch_operands = 0 : i64, tpu.core_type = #tpu.core_type<tc>, window_params = [{transform_indices = @transform_0, window_bounds = array<i64: 128, 32>}, {pipeline_mode = #tpu.pipeline_mode<synchronous>, transform_indices = @transform_1, window_bounds = array<i64: 32, 128>}, {transform_indices = @transform_2, window_bounds = array<i64: 128, 128>}]} {
    %c0 = arith.constant 0 : index
    %c0_0 = arith.constant 0 : index
    %0 = vector.load %arg1[%c0, %c0_0] : memref<128x32xbf16, #tpu.memory_space<vmem>>, vector<128x32xbf16>
    %c0_1 = arith.constant 0 : index
    %c0_2 = arith.constant 0 : index
    %1 = vector.load %arg2[%c0_1, %c0_2] : memref<32x128xbf16, #tpu.memory_space<vmem>>, vector<32x128xbf16>
    %cst = arith.constant dense<0.000000e+00> : vector<128x128xf32>
    %2 = tpu.matmul %0, %1, %cst {dimension_numbers = #tpu.dot_dimension_numbers<[1], [0], [0], [1], [0, 0, 1, 1], [], []>} : vector<128x32xbf16>, vector<32x128xbf16>, vector<128x128xf32> -> vector<128x128xf32>
    %3 = arith.truncf %2 : vector<128x128xf32> to vector<128x128xbf16>
    %c0_3 = arith.constant 0 : index
    %c0_4 = arith.constant 0 : index
    %4 = vector.load %arg3[%c0_3, %c0_4] : memref<128x128xbf16, #tpu.memory_space<vmem>>, vector<128x128xbf16>
    tpu.vector_store %arg3[%c0_3, %c0_4], %3 {strides = array<i32>} : memref<128x128xbf16, #tpu.memory_space<vmem>>, vector<128x128xbf16>,
    return
  }
  func.func @transform_0(%arg0: i32) -> (i32, i32) {
    %c0_i32 = arith.constant 0 : i32
    %c0_i32_0 = arith.constant 0 : i32
    return %arg0, %c0_i32 : i32, i32
  }
  func.func @transform_1(%arg0: i32) -> (i32, i32) {
    %c0_i32 = arith.constant 0 : i32
    %c0_i32_0 = arith.constant 0 : i32
    %c0_i32_1 = arith.constant 0 : i32
    return %c0_i32, %c0_i32_0 : i32, i32
  }
  func.func @transform_2(%arg0: i32) -> (i32, i32) {
    %c0_i32 = arith.constant 0 : i32
    %c0_i32_0 = arith.constant 0 : i32
    return %arg0, %c0_i32 : i32, i32
  }
}

module attributes {stable_mosaic.version = 11 : i64} {
  func.func @_hidden_kernel(%arg0: i32, %arg1: memref<128x128xbf16, #tpu.memory_space<vmem>>, %arg2: memref<128x128xbf16, #tpu.memory_space<vmem>>, %arg3: memref<128x128xbf16, #tpu.memory_space<vmem>>, %arg4: memref<128x128xbf16, #tpu.memory_space<vmem>>, %arg5: memref<128x128xbf16, #tpu.memory_space<vmem>>) attributes {dimension_semantics = [#tpu.dimension_semantics<parallel>], iteration_bounds = array<i64: 1>, scalar_prefetch = 0 : i64, scratch_operands = 0 : i64, tpu.core_type = #tpu.core_type<tc>, window_params = [{pipeline_mode = #tpu.pipeline_mode<synchronous>, transform_indices = @transform_0, window_bounds = array<i64: 128, 128>}, {transform_indices = @transform_1, window_bounds = array<i64: 128, 128>}, {transform_indices = @transform_2, window_bounds = array<i64: 128, 128>}, {transform_indices = @transform_3, window_bounds = array<i64: 128, 128>}, {transform_indices = @transform_4, window_bounds = array<i64: 128, 128>}]} {
    %c0 = arith.constant 0 : index
    %c0_0 = arith.constant 0 : index
    %0 = vector.load %arg1[%c0, %c0_0] : memref<128x128xbf16, #tpu.memory_space<vmem>>, vector<128x128xbf16>
    %1 = tpu.iota {dimensions = array<i32: 1>} : vector<1x128xi32>
    %c0_1 = arith.constant 0 : index
    %c0_2 = arith.constant 0 : index
    %2 = vector.load %arg2[%c0_1, %c0_2] : memref<128x128xbf16, #tpu.memory_space<vmem>>, vector<128x128xbf16>
    %cst = arith.constant dense<0.000000e+00> : vector<128x128xf32>
    %3 = tpu.matmul %2, %0, %cst {dimension_numbers = #tpu.dot_dimension_numbers<[1], [0], [0], [1], [0, 0, 1, 1], [], []>} : vector<128x128xbf16>, vector<128x128xbf16>, vector<128x128xf32> -> vector<128x128xf32>
    %cst_3 = arith.constant 0.000000e+00 : f32
    %4 = vector.broadcast %cst_3 : f32 to vector<128x128xf32>
    %5 = arith.maximumf %3, %4 : vector<128x128xf32>
    %c0_i32 = arith.constant 0 : i32
    %6 = vector.broadcast %c0_i32 : i32 to vector<1x128xi32>
    %7 = arith.cmpi sge, %1, %6 : vector<1x128xi32>
    %c32_i32 = arith.constant 32 : i32
    %8 = vector.broadcast %c32_i32 : i32 to vector<1x128xi32>
    %9 = arith.cmpi slt, %1, %8 : vector<1x128xi32>
    %10 = arith.andi %7, %9 : vector<1x128xi1>
    %cst_4 = arith.constant 1.000000e+00 : f32
    %cst_5 = arith.constant 0.000000e+00 : f32
    %11 = vector.broadcast %cst_4 : f32 to vector<1x128xf32>
    %12 = vector.broadcast %cst_5 : f32 to vector<1x128xf32>
    %13 = arith.select %10, %11, %12 : vector<1x128xi1>, vector<1x128xf32>
    %14 = vector.broadcast %13 : vector<1x128xf32> to vector<128x128xf32>
    %15 = arith.mulf %5, %14 : vector<128x128xf32>
    %c0_6 = arith.constant 0 : index
    %c0_7 = arith.constant 0 : index
    %16 = vector.load %arg3[%c0_6, %c0_7] : memref<128x128xbf16, #tpu.memory_space<vmem>>, vector<128x128xbf16>
    %cst_8 = arith.constant dense<0.000000e+00> : vector<128x128xf32>
    %17 = tpu.matmul %16, %0, %cst_8 {dimension_numbers = #tpu.dot_dimension_numbers<[1], [0], [0], [1], [0, 0, 1, 1], [], []>} : vector<128x128xbf16>, vector<128x128xbf16>, vector<128x128xf32> -> vector<128x128xf32>
    %cst_9 = arith.constant 0.000000e+00 : f32
    %18 = vector.broadcast %cst_9 : f32 to vector<128x128xf32>
    %19 = arith.maximumf %17, %18 : vector<128x128xf32>
    %c32_i32_10 = arith.constant 32 : i32
    %20 = vector.broadcast %c32_i32_10 : i32 to vector<1x128xi32>
    %21 = arith.cmpi sge, %1, %20 : vector<1x128xi32>
    %c64_i32 = arith.constant 64 : i32
    %22 = vector.broadcast %c64_i32 : i32 to vector<1x128xi32>
    %23 = arith.cmpi slt, %1, %22 : vector<1x128xi32>
    %24 = arith.andi %21, %23 : vector<1x128xi1>
    %cst_11 = arith.constant 1.000000e+00 : f32
    %cst_12 = arith.constant 0.000000e+00 : f32
    %25 = vector.broadcast %cst_11 : f32 to vector<1x128xf32>
    %26 = vector.broadcast %cst_12 : f32 to vector<1x128xf32>
    %27 = arith.select %24, %25, %26 : vector<1x128xi1>, vector<1x128xf32>
    %28 = vector.broadcast %27 : vector<1x128xf32> to vector<128x128xf32>
    %29 = arith.mulf %19, %28 : vector<128x128xf32>
    %30 = arith.addf %15, %29 : vector<128x128xf32>
    %c0_13 = arith.constant 0 : index
    %c0_14 = arith.constant 0 : index
    %31 = vector.load %arg4[%c0_13, %c0_14] : memref<128x128xbf16, #tpu.memory_space<vmem>>, vector<128x128xbf16>
    %cst_15 = arith.constant dense<0.000000e+00> : vector<128x128xf32>
    %32 = tpu.matmul %31, %0, %cst_15 {dimension_numbers = #tpu.dot_dimension_numbers<[1], [0], [0], [1], [0, 0, 1, 1], [], []>} : vector<128x128xbf16>, vector<128x128xbf16>, vector<128x128xf32> -> vector<128x128xf32>
    %cst_16 = arith.constant 0.000000e+00 : f32
    %33 = vector.broadcast %cst_16 : f32 to vector<128x128xf32>
    %34 = arith.maximumf %32, %33 : vector<128x128xf32>
    %c64_i32_17 = arith.constant 64 : i32
    %35 = vector.broadcast %c64_i32_17 : i32 to vector<1x128xi32>
    %36 = arith.cmpi sge, %1, %35 : vector<1x128xi32>
    %c96_i32 = arith.constant 96 : i32
    %37 = vector.broadcast %c96_i32 : i32 to vector<1x128xi32>
    %38 = arith.cmpi slt, %1, %37 : vector<1x128xi32>
    %39 = arith.andi %36, %38 : vector<1x128xi1>
    %cst_18 = arith.constant 1.000000e+00 : f32
    %cst_19 = arith.constant 0.000000e+00 : f32
    %40 = vector.broadcast %cst_18 : f32 to vector<1x128xf32>
    %41 = vector.broadcast %cst_19 : f32 to vector<1x128xf32>
    %42 = arith.select %39, %40, %41 : vector<1x128xi1>, vector<1x128xf32>
    %43 = vector.broadcast %42 : vector<1x128xf32> to vector<128x128xf32>
    %44 = arith.mulf %34, %43 : vector<128x128xf32>
    %45 = arith.addf %30, %44 : vector<128x128xf32>
    %46 = arith.truncf %45 : vector<128x128xf32> to vector<128x128xbf16>
    %c0_20 = arith.constant 0 : index
    %c0_21 = arith.constant 0 : index
    %47 = vector.load %arg5[%c0_20, %c0_21] : memref<128x128xbf16, #tpu.memory_space<vmem>>, vector<128x128xbf16>
    tpu.vector_store %arg5[%c0_20, %c0_21], %46 {strides = array<i32>} : memref<128x128xbf16, #tpu.memory_space<vmem>>, vector<128x128xbf16>,
    return
  }
  func.func @transform_0(%arg0: i32) -> (i32, i32) {
    %c0_i32 = arith.constant 0 : i32
    %c0_i32_0 = arith.constant 0 : i32
    %c0_i32_1 = arith.constant 0 : i32
    return %c0_i32, %c0_i32_0 : i32, i32
  }
  func.func @transform_1(%arg0: i32) -> (i32, i32) {
    %c0_i32 = arith.constant 0 : i32
    %c0_i32_0 = arith.constant 0 : i32
    return %arg0, %c0_i32 : i32, i32
  }
  func.func @transform_2(%arg0: i32) -> (i32, i32) {
    %c0_i32 = arith.constant 0 : i32
    %c0_i32_0 = arith.constant 0 : i32
    return %arg0, %c0_i32 : i32, i32
  }
  func.func @transform_3(%arg0: i32) -> (i32, i32) {
    %c0_i32 = arith.constant 0 : i32
    %c0_i32_0 = arith.constant 0 : i32
    return %arg0, %c0_i32 : i32, i32
  }
  func.func @transform_4(%arg0: i32) -> (i32, i32) {
    %c0_i32 = arith.constant 0 : i32
    %c0_i32_0 = arith.constant 0 : i32
    return %arg0, %c0_i32 : i32, i32
  }
}

module attributes {stable_mosaic.version = 11 : i64} {
  func.func @_output_kernel(%arg0: i32, %arg1: memref<1x1xf32, #tpu.memory_space<vmem>>, %arg2: memref<128x128xbf16, #tpu.memory_space<vmem>>, %arg3: memref<128x128xbf16, #tpu.memory_space<vmem>>, %arg4: memref<128x128xbf16, #tpu.memory_space<vmem>>, %arg5: memref<128x128xbf16, #tpu.memory_space<vmem>>, %arg6: memref<128x128xf32, #tpu.memory_space<vmem>>, %arg7: memref<1x128xf32, #tpu.memory_space<vmem>>, %arg8: memref<1x128xf32, #tpu.memory_space<vmem>>, %arg9: memref<1x128xf32, #tpu.memory_space<vmem>>, %arg10: memref<128x128xf32, #tpu.memory_space<vmem>>) attributes {dimension_semantics = [#tpu.dimension_semantics<parallel>], iteration_bounds = array<i64: 1>, scalar_prefetch = 0 : i64, scratch_operands = 0 : i64, tpu.core_type = #tpu.core_type<tc>, window_params = [{pipeline_mode = #tpu.pipeline_mode<synchronous>, transform_indices = @transform_0, window_bounds = array<i64: 1, 1>}, {pipeline_mode = #tpu.pipeline_mode<synchronous>, transform_indices = @transform_1, window_bounds = array<i64: 128, 128>}, {transform_indices = @transform_2, window_bounds = array<i64: 128, 128>}, {transform_indices = @transform_3, window_bounds = array<i64: 128, 128>}, {transform_indices = @transform_4, window_bounds = array<i64: 128, 128>}, {pipeline_mode = #tpu.pipeline_mode<synchronous>, transform_indices = @transform_5, window_bounds = array<i64: 128, 128>}, {pipeline_mode = #tpu.pipeline_mode<synchronous>, transform_indices = @transform_6, window_bounds = array<i64: 1, 128>}, {pipeline_mode = #tpu.pipeline_mode<synchronous>, transform_indices = @transform_7, window_bounds = array<i64: 1, 128>}, {pipeline_mode = #tpu.pipeline_mode<synchronous>, transform_indices = @transform_8, window_bounds = array<i64: 1, 128>}, {transform_indices = @transform_9, window_bounds = array<i64: 128, 128>}]} {
    %c0 = arith.constant 0 : index
    %c0_0 = arith.constant 0 : index
    %0 = vector.load %arg2[%c0, %c0_0] : memref<128x128xbf16, #tpu.memory_space<vmem>>, vector<128x128xbf16>
    %c0_1 = arith.constant 0 : index
    %c0_2 = arith.constant 0 : index
    %1 = vector.load %arg1[%c0_1, %c0_2] : memref<1x1xf32, #tpu.memory_space<vmem>>, vector<1x1xf32>
    %2 = tpu.iota {dimensions = array<i32: 1>} : vector<1x128xi32>
    %c0_3 = arith.constant 0 : index
    %c0_4 = arith.constant 0 : index
    %3 = vector.load %arg3[%c0_3, %c0_4] : memref<128x128xbf16, #tpu.memory_space<vmem>>, vector<128x128xbf16>
    %cst = arith.constant dense<0.000000e+00> : vector<128x128xf32>
    %4 = tpu.matmul %3, %0, %cst {dimension_numbers = #tpu.dot_dimension_numbers<[1], [0], [0], [1], [0, 0, 1, 1], [], []>} : vector<128x128xbf16>, vector<128x128xbf16>, vector<128x128xf32> -> vector<128x128xf32>
    %c0_i32 = arith.constant 0 : i32
    %5 = vector.broadcast %c0_i32 : i32 to vector<1x128xi32>
    %6 = arith.cmpi sge, %2, %5 : vector<1x128xi32>
    %c32_i32 = arith.constant 32 : i32
    %7 = vector.broadcast %c32_i32 : i32 to vector<1x128xi32>
    %8 = arith.cmpi slt, %2, %7 : vector<1x128xi32>
    %9 = arith.andi %6, %8 : vector<1x128xi1>
    %cst_5 = arith.constant 1.000000e+00 : f32
    %cst_6 = arith.constant 0.000000e+00 : f32
    %10 = vector.broadcast %cst_5 : f32 to vector<1x128xf32>
    %11 = vector.broadcast %cst_6 : f32 to vector<1x128xf32>
    %12 = arith.select %9, %10, %11 : vector<1x128xi1>, vector<1x128xf32>
    %13 = vector.broadcast %12 : vector<1x128xf32> to vector<128x128xf32>
    %14 = arith.mulf %4, %13 : vector<128x128xf32>
    %15 = vector.broadcast %1 : vector<1x1xf32> to vector<128x128xf32>
    %16 = arith.mulf %15, %14 : vector<128x128xf32>
    %cst_7 = arith.constant 1.000000e+00 : f32
    %17 = vector.broadcast %cst_7 : f32 to vector<1x1xf32>
    %18 = arith.subf %17, %1 : vector<1x1xf32>
    %c0_8 = arith.constant 0 : index
    %c0_9 = arith.constant 0 : index
    %19 = vector.load %arg4[%c0_8, %c0_9] : memref<128x128xbf16, #tpu.memory_space<vmem>>, vector<128x128xbf16>
    %cst_10 = arith.constant dense<0.000000e+00> : vector<128x128xf32>
    %20 = tpu.matmul %19, %0, %cst_10 {dimension_numbers = #tpu.dot_dimension_numbers<[1], [0], [0], [1], [0, 0, 1, 1], [], []>} : vector<128x128xbf16>, vector<128x128xbf16>, vector<128x128xf32> -> vector<128x128xf32>
    %c32_i32_11 = arith.constant 32 : i32
    %21 = vector.broadcast %c32_i32_11 : i32 to vector<1x128xi32>
    %22 = arith.cmpi sge, %2, %21 : vector<1x128xi32>
    %c64_i32 = arith.constant 64 : i32
    %23 = vector.broadcast %c64_i32 : i32 to vector<1x128xi32>
    %24 = arith.cmpi slt, %2, %23 : vector<1x128xi32>
    %25 = arith.andi %22, %24 : vector<1x128xi1>
    %cst_12 = arith.constant 1.000000e+00 : f32
    %cst_13 = arith.constant 0.000000e+00 : f32
    %26 = vector.broadcast %cst_12 : f32 to vector<1x128xf32>
    %27 = vector.broadcast %cst_13 : f32 to vector<1x128xf32>
    %28 = arith.select %25, %26, %27 : vector<1x128xi1>, vector<1x128xf32>
    %29 = vector.broadcast %28 : vector<1x128xf32> to vector<128x128xf32>
    %30 = arith.mulf %20, %29 : vector<128x128xf32>
    %c0_14 = arith.constant 0 : index
    %c0_15 = arith.constant 0 : index
    %31 = vector.load %arg5[%c0_14, %c0_15] : memref<128x128xbf16, #tpu.memory_space<vmem>>, vector<128x128xbf16>
    %cst_16 = arith.constant dense<0.000000e+00> : vector<128x128xf32>
    %32 = tpu.matmul %31, %0, %cst_16 {dimension_numbers = #tpu.dot_dimension_numbers<[1], [0], [0], [1], [0, 0, 1, 1], [], []>} : vector<128x128xbf16>, vector<128x128xbf16>, vector<128x128xf32> -> vector<128x128xf32>
    %c64_i32_17 = arith.constant 64 : i32
    %33 = vector.broadcast %c64_i32_17 : i32 to vector<1x128xi32>
    %34 = arith.cmpi sge, %2, %33 : vector<1x128xi32>
    %c96_i32 = arith.constant 96 : i32
    %35 = vector.broadcast %c96_i32 : i32 to vector<1x128xi32>
    %36 = arith.cmpi slt, %2, %35 : vector<1x128xi32>
    %37 = arith.andi %34, %36 : vector<1x128xi1>
    %cst_18 = arith.constant 1.000000e+00 : f32
    %cst_19 = arith.constant 0.000000e+00 : f32
    %38 = vector.broadcast %cst_18 : f32 to vector<1x128xf32>
    %39 = vector.broadcast %cst_19 : f32 to vector<1x128xf32>
    %40 = arith.select %37, %38, %39 : vector<1x128xi1>, vector<1x128xf32>
    %41 = vector.broadcast %40 : vector<1x128xf32> to vector<128x128xf32>
    %42 = arith.mulf %32, %41 : vector<128x128xf32>
    %43 = arith.addf %30, %42 : vector<128x128xf32>
    %44 = vector.broadcast %18 : vector<1x1xf32> to vector<128x128xf32>
    %45 = arith.mulf %44, %43 : vector<128x128xf32>
    %46 = arith.addf %16, %45 : vector<128x128xf32>
    %c0_20 = arith.constant 0 : index
    %c0_21 = arith.constant 0 : index
    %47 = vector.load %arg7[%c0_20, %c0_21] : memref<1x128xf32, #tpu.memory_space<vmem>>, vector<1x128xf32>
    %48 = vector.broadcast %1 : vector<1x1xf32> to vector<1x128xf32>
    %49 = arith.mulf %48, %47 : vector<1x128xf32>
    %cst_22 = arith.constant 1.000000e+00 : f32
    %50 = vector.broadcast %cst_22 : f32 to vector<1x1xf32>
    %51 = arith.subf %50, %1 : vector<1x1xf32>
    %c0_23 = arith.constant 0 : index
    %c0_24 = arith.constant 0 : index
    %52 = vector.load %arg8[%c0_23, %c0_24] : memref<1x128xf32, #tpu.memory_space<vmem>>, vector<1x128xf32>
    %c0_25 = arith.constant 0 : index
    %c0_26 = arith.constant 0 : index
    %53 = vector.load %arg9[%c0_25, %c0_26] : memref<1x128xf32, #tpu.memory_space<vmem>>, vector<1x128xf32>
    %54 = arith.addf %52, %53 : vector<1x128xf32>
    %55 = vector.broadcast %51 : vector<1x1xf32> to vector<1x128xf32>
    %56 = arith.mulf %55, %54 : vector<1x128xf32>
    %57 = arith.addf %49, %56 : vector<1x128xf32>
    %c0_27 = arith.constant 0 : index
    %c0_28 = arith.constant 0 : index
    %58 = vector.load %arg6[%c0_27, %c0_28] : memref<128x128xf32, #tpu.memory_space<vmem>>, vector<128x128xf32>
    %cst_29 = arith.constant dense<0.000000e+00> : vector<128x128xf32>
    %59 = tpu.matmul %46, %58, %cst_29 {dimension_numbers = #tpu.dot_dimension_numbers<[1], [0], [0], [1], [0, 0, 1, 1], [], []>} : vector<128x128xf32>, vector<128x128xf32>, vector<128x128xf32> -> vector<128x128xf32>
    %60 = vector.broadcast %57 : vector<1x128xf32> to vector<128x128xf32>
    %61 = arith.addf %59, %60 : vector<128x128xf32>
    %62 = tpu.iota {dimensions = array<i32: 1>} : vector<1x128xi32>
    %c8_i32 = arith.constant 8 : i32
    %63 = vector.broadcast %c8_i32 : i32 to vector<1x128xi32>
    %64 = arith.cmpi slt, %62, %63 : vector<1x128xi32>
    %cst_30 = arith.constant 0.000000e+00 : f32
    %cst_31 = arith.constant -1.000000e+30 : f32
    %65 = vector.broadcast %cst_30 : f32 to vector<1x128xf32>
    %66 = vector.broadcast %cst_31 : f32 to vector<1x128xf32>
    %67 = arith.select %64, %65, %66 : vector<1x128xi1>, vector<1x128xf32>
    %68 = vector.broadcast %67 : vector<1x128xf32> to vector<128x128xf32>
    %69 = arith.addf %61, %68 : vector<128x128xf32>
    %cst_32 = arith.constant dense<0xFF800000> : vector<128xf32>
    %70 = vector.multi_reduction <maximumf>, %69, %cst_32 [1] : vector<128x128xf32> to vector<128xf32>
    %71 = vector.shape_cast %70 : vector<128xf32> to vector<128x1xf32>
    %72 = vector.broadcast %71 : vector<128x1xf32> to vector<128x128xf32>
    %73 = arith.subf %69, %72 : vector<128x128xf32>
    %74 = math.exp %73 : vector<128x128xf32>
    %cst_33 = arith.constant dense<0.000000e+00> : vector<128xf32>
    %75 = vector.multi_reduction <add>, %74, %cst_33 [1] : vector<128x128xf32> to vector<128xf32>
    %76 = vector.shape_cast %75 : vector<128xf32> to vector<128x1xf32>
    %77 = math.log %76 : vector<128x1xf32>
    %78 = vector.broadcast %77 : vector<128x1xf32> to vector<128x128xf32>
    %79 = arith.subf %73, %78 : vector<128x128xf32>
    %c0_34 = arith.constant 0 : index
    %c0_35 = arith.constant 0 : index
    %80 = vector.load %arg10[%c0_34, %c0_35] : memref<128x128xf32, #tpu.memory_space<vmem>>, vector<128x128xf32>
    tpu.vector_store %arg10[%c0_34, %c0_35], %79 {strides = array<i32>} : memref<128x128xf32, #tpu.memory_space<vmem>>, vector<128x128xf32>,
    return
  }
  func.func @transform_0(%arg0: i32) -> (i32, i32) {
    %c0_i32 = arith.constant 0 : i32
    %c0_i32_0 = arith.constant 0 : i32
    %c0_i32_1 = arith.constant 0 : i32
    return %c0_i32, %c0_i32_0 : i32, i32
  }
  func.func @transform_1(%arg0: i32) -> (i32, i32) {
    %c0_i32 = arith.constant 0 : i32
    %c0_i32_0 = arith.constant 0 : i32
    %c0_i32_1 = arith.constant 0 : i32
    return %c0_i32, %c0_i32_0 : i32, i32
  }
  func.func @transform_2(%arg0: i32) -> (i32, i32) {
    %c0_i32 = arith.constant 0 : i32
    %c0_i32_0 = arith.constant 0 : i32
    return %arg0, %c0_i32 : i32, i32
  }
  func.func @transform_3(%arg0: i32) -> (i32, i32) {
    %c0_i32 = arith.constant 0 : i32
    %c0_i32_0 = arith.constant 0 : i32
    return %arg0, %c0_i32 : i32, i32
  }
  func.func @transform_4(%arg0: i32) -> (i32, i32) {
    %c0_i32 = arith.constant 0 : i32
    %c0_i32_0 = arith.constant 0 : i32
    return %arg0, %c0_i32 : i32, i32
  }
  func.func @transform_5(%arg0: i32) -> (i32, i32) {
    %c0_i32 = arith.constant 0 : i32
    %c0_i32_0 = arith.constant 0 : i32
    %c0_i32_1 = arith.constant 0 : i32
    return %c0_i32, %c0_i32_0 : i32, i32
  }
  func.func @transform_6(%arg0: i32) -> (i32, i32) {
    %c0_i32 = arith.constant 0 : i32
    %c0_i32_0 = arith.constant 0 : i32
    %c0_i32_1 = arith.constant 0 : i32
    return %c0_i32, %c0_i32_0 : i32, i32
  }
  func.func @transform_7(%arg0: i32) -> (i32, i32) {
    %c0_i32 = arith.constant 0 : i32
    %c0_i32_0 = arith.constant 0 : i32
    %c0_i32_1 = arith.constant 0 : i32
    return %c0_i32, %c0_i32_0 : i32, i32
  }
  func.func @transform_8(%arg0: i32) -> (i32, i32) {
    %c0_i32 = arith.constant 0 : i32
    %c0_i32_0 = arith.constant 0 : i32
    %c0_i32_1 = arith.constant 0 : i32
    return %c0_i32, %c0_i32_0 : i32, i32
  }
  func.func @transform_9(%arg0: i32) -> (i32, i32) {
    %c0_i32 = arith.constant 0 : i32
    %c0_i32_0 = arith.constant 0 : i32
    return %arg0, %c0_i32 : i32, i32
  }
}

</mosaic_0001>

<llo_original>
// kernel: deepgcn_forward.3
$region0: #{deepgcn_forward.3}
  #allocation0 [shape = 'u32[]', space=smem, size = 0x4, offset = 0x4, fixed_abs, tag = 'smem constant byte address 0x4 - core index']
  #allocation1 [shape = 'u32[144,128]{1,0:T(1,128)}', space=vmem, size = 0x12000, scoped, tag = 'internal scratch']
  %s0 = inlined_call_operand.vmem [shape: bf16[128,32], index: 0, kind: input, shape index: {}]
  %s1 = inlined_call_operand.vmem [shape: bf16[32,128], index: 1, kind: input, shape index: {}]
  %s2 = inlined_call_operand.vmem [shape: bf16[128,128], index: 2, kind: output, shape index: {}]
  %s3 = sld [smem:[#allocation0]]
  $region18: #{deepgcn_forward.3} parent=0
    _
  %s5 = ssub.s32 1, %s3
  %s6 = scalar_select 0, %s5, %s3
  // Predicated region
  $region2: #{deepgcn_forward.3} parent=0 // pred_check
    _
  $region3: #{deepgcn_forward.3} parent=0 // pred_check_branch
    %8 = sbr.rel (0) target = $region5
  $region4: #{deepgcn_forward.3} parent=0 // pred_region
    _
  $region5: #{deepgcn_forward.3} parent=0 // pred_fallthru
    _
  // Predicated region
  $region6: #{deepgcn_forward.3} parent=0 // pred_check
    _
  $region7: #{deepgcn_forward.3} parent=0 // pred_check_branch
    %10 = sbr.rel (0) target = $region9
  $region8: #{deepgcn_forward.3} parent=0 // pred_region
    _
  $region9: #{deepgcn_forward.3} parent=0 // pred_fallthru
    _
  %v12 = vld [vmem:[%s0] sm:$0xf]
  %v13 = vld [vmem:[%s0 + $0x4] sm:$0xf]
  %v14 = vld [vmem:[%s0 + $0x8] sm:$0xf]
  %v15 = vld [vmem:[%s0 + $0xc] sm:$0xf]
  %v16 = vld [vmem:[%s0 + $0x10] sm:$0xf]
  %v17 = vld [vmem:[%s0 + $0x14] sm:$0xf]
  %v18 = vld [vmem:[%s0 + $0x18] sm:$0xf]
  %v19 = vld [vmem:[%s0 + $0x1c] sm:$0xf]
  %v20 = vld [vmem:[%s0 + $0x20] sm:$0xf]
  %v21 = vld [vmem:[%s0 + $0x24] sm:$0xf]
  %v22 = vld [vmem:[%s0 + $0x28] sm:$0xf]
  %v23 = vld [vmem:[%s0 + $0x2c] sm:$0xf]
  %v24 = vld [vmem:[%s0 + $0x30] sm:$0xf]
  %v25 = vld [vmem:[%s0 + $0x34] sm:$0xf]
  %v26 = vld [vmem:[%s0 + $0x38] sm:$0xf]
  %v27 = vld [vmem:[%s0 + $0x3c] sm:$0xf]
  %v28 = vld [vmem:[%s1] sm:$0xf]
  %v29 = vld [vmem:[%s1 + $0x4] sm:$0xf]
  %v30 = vld [vmem:[%s1 + $0x8] sm:$0xf]
  %v31 = vld [vmem:[%s1 + $0xc] sm:$0xf]
  %v48 = vunpack.c.l.b16 %v12
  %v49 = vunpack.c.l.b16 %v13
  %v50 = vunpack.c.l.b16 %v14
  %v51 = vunpack.c.l.b16 %v15
  %v52 = vunpack.c.l.b16 %v16
  %v53 = vunpack.c.l.b16 %v17
  %v54 = vunpack.c.l.b16 %v18
  %v55 = vunpack.c.l.b16 %v19
  %v56 = vunpack.c.l.b16 %v20
  %v57 = vunpack.c.l.b16 %v21
  %v58 = vunpack.c.l.b16 %v22
  %v59 = vunpack.c.l.b16 %v23
  %v60 = vunpack.c.l.b16 %v24
  %v61 = vunpack.c.l.b16 %v25
  %v62 = vunpack.c.l.b16 %v26
  %v63 = vunpack.c.l.b16 %v27
  %v64 = vpack.c.b16 %v49, %v48
  %v65 = vpack.c.b16 %v51, %v50
  %v66 = vpack.c.b16 %v53, %v52
  %v67 = vpack.c.b16 %v55, %v54
  %v68 = vpack.c.b16 %v57, %v56
  %v69 = vpack.c.b16 %v59, %v58
  %v70 = vpack.c.b16 %v61, %v60
  %v71 = vpack.c.b16 %v63, %v62
  %v76 = vunpack.c.l.b16 %v28
  %v77 = vunpack.c.l.b16 %v29
  %v78 = vunpack.c.l.b16 %v30
  %v79 = vunpack.c.l.b16 %v31
  %v80 = vpack.c.b16 %v77, %v76
  %v81 = vpack.c.b16 %v79, %v78
  %vm84 = vcmask 261120
  %v86 = vsel %vm84, %v64, 0
  %v89 = vsel %vm84, %v65, 0
  %v92 = vsel %vm84, %v66, 0
  %v95 = vsel %vm84, %v67, 0
  %v98 = vsel %vm84, %v68, 0
  %v101 = vsel %vm84, %v69, 0
  %v104 = vsel %vm84, %v70, 0
  %v107 = vsel %vm84, %v71, 0
  %109 = vmatprep.subr.bf16.mxu0 0
  %110 = vmatpush1.bf16.msra.mxu0 0
  %111 = vmatprep.subr.bf16.mxu0 0
  %112 = vmatpush1.bf16.msra.mxu0 0
  %113 = vmatprep.subr.bf16.mxu0 0
  %114 = vmatpush1.bf16.msra.mxu0 0
  %115 = vmatprep.subr.bf16.mxu0 0
  %116 = vmatpush1.bf16.msra.mxu0 0
  %117 = vmatprep.subr.bf16.mxu0 0
  %118 = vmatpush1.bf16.msra.mxu0 0
  %119 = vmatprep.subr.bf16.mxu0 0
  %120 = vmatpush1.bf16.msra.mxu0 0
  %121 = vmatprep.subr.bf16.mxu0 0
  %122 = vmatpush1.bf16.msra.mxu0 %v81
  %123 = vmatprep.subr.bf16.mxu0 0
  %124 = vmatpush1.bf16.msra.mxu0 %v80
  %125 = vmatprep.subr.bf16.mxu0 0
  %126 = vmatpush2.bf16.msra.mxu0 0
  %127 = vmatprep.subr.bf16.mxu0 0
  %128 = vmatpush2.bf16.msra.mxu0 0
  %129 = vmatprep.subr.bf16.mxu0 0
  %130 = vmatpush2.bf16.msra.mxu0 0
  %131 = vmatprep.subr.bf16.mxu0 0
  %132 = vmatpush2.bf16.msra.mxu0 0
  %133 = vmatprep.subr.bf16.mxu0 0
  %134 = vmatpush2.bf16.msra.mxu0 0
  %135 = vmatprep.subr.bf16.mxu0 0
  %136 = vmatpush2.bf16.msra.mxu0 0
  %137 = vmatprep.subr.bf16.mxu0 0
  %138 = vmatpush2.bf16.msra.mxu0 0
  %139 = vmatprep.subr.bf16.mxu0 0
  %140 = vmatpush2.bf16.msra.mxu0 0
  %141 = vmatprep.mubr.bf16.mxu0 0
  %142 = vmatmul.mubr.bf16.gmra.mxu0 %v86
  %v143 = vpop.f32.mrf.mxu0
  %v144 = vadd.f32 0.0, %v143
  %v145 = vpop.f32.mrf.mxu0
  %v146 = vpop.f32.mrf.mxu0
  %v147 = vadd.f32 0.0, %v146
  %v148 = vpop.f32.mrf.mxu0
  %149 = vmatprep.mubr.bf16.mxu0 0
  %150 = vmatmul.mubr.bf16.gmra.mxu0 %v89
  %v151 = vpop.f32.mrf.mxu0
  %v152 = vadd.f32 0.0, %v151
  %v153 = vpop.f32.mrf.mxu0
  %v154 = vpop.f32.mrf.mxu0
  %v155 = vadd.f32 0.0, %v154
  %v156 = vpop.f32.mrf.mxu0
  %157 = vmatprep.mubr.bf16.mxu0 0
  %158 = vmatmul.mubr.bf16.gmra.mxu0 %v92
  %v159 = vpop.f32.mrf.mxu0
  %v160 = vadd.f32 0.0, %v159
  %v161 = vpop.f32.mrf.mxu0
  %v162 = vpop.f32.mrf.mxu0
  %v163 = vadd.f32 0.0, %v162
  %v164 = vpop.f32.mrf.mxu0
  %165 = vmatprep.mubr.bf16.mxu0 0
  %166 = vmatmul.mubr.bf16.gmra.mxu0 %v95
  %v167 = vpop.f32.mrf.mxu0
  %v168 = vadd.f32 0.0, %v167
  %v169 = vpop.f32.mrf.mxu0
  %v170 = vpop.f32.mrf.mxu0
  %v171 = vadd.f32 0.0, %v170
  %v172 = vpop.f32.mrf.mxu0
  %173 = vmatprep.mubr.bf16.mxu0 0
  %174 = vmatmul.mubr.bf16.gmra.mxu0 %v98
  %v175 = vpop.f32.mrf.mxu0
  %v176 = vadd.f32 0.0, %v175
  %v177 = vpop.f32.mrf.mxu0
  %v178 = vpop.f32.mrf.mxu0
  %v179 = vadd.f32 0.0, %v178
  %v180 = vpop.f32.mrf.mxu0
  %181 = vmatprep.mubr.bf16.mxu0 0
  %182 = vmatmul.mubr.bf16.gmra.mxu0 %v101
  %v183 = vpop.f32.mrf.mxu0
  %v184 = vadd.f32 0.0, %v183
  %v185 = vpop.f32.mrf.mxu0
  %v186 = vpop.f32.mrf.mxu0
  %v187 = vadd.f32 0.0, %v186
  %v188 = vpop.f32.mrf.mxu0
  %189 = vmatprep.mubr.bf16.mxu0 0
  %190 = vmatmul.mubr.bf16.gmra.mxu0 %v104
  %v191 = vpop.f32.mrf.mxu0
  %v192 = vadd.f32 0.0, %v191
  %v193 = vpop.f32.mrf.mxu0
  %v194 = vpop.f32.mrf.mxu0
  %v195 = vadd.f32 0.0, %v194
  %v196 = vpop.f32.mrf.mxu0
  %197 = vmatprep.mubr.bf16.mxu0 0
  %198 = vmatmul.mubr.bf16.gmra.mxu0 %v107
  %v199 = vpop.f32.mrf.mxu0
  %v200 = vadd.f32 0.0, %v199
  %v201 = vpop.f32.mrf.mxu0
  %v202 = vpop.f32.mrf.mxu0
  %v203 = vadd.f32 0.0, %v202
  %v204 = vpop.f32.mrf.mxu0
  %205 = vdwg.mxu0
  %v206 = vpack.c.bf16 %v147, %v144
  %v207 = vpack.c.bf16 %v155, %v152
  %v208 = vpack.c.bf16 %v163, %v160
  %v209 = vpack.c.bf16 %v171, %v168
  %v210 = vpack.c.bf16 %v179, %v176
  %v211 = vpack.c.bf16 %v187, %v184
  %v212 = vpack.c.bf16 %v195, %v192
  %v213 = vpack.c.bf16 %v203, %v200
  %v222 = vunpack.c.l.b16 %v206
  %v223 = vunpack.c.h.b16 %v206
  %v224 = vunpack.c.l.b16 %v207
  %v225 = vunpack.c.h.b16 %v207
  %v226 = vunpack.c.l.b16 %v208
  %v227 = vunpack.c.h.b16 %v208
  %v228 = vunpack.c.l.b16 %v209
  %v229 = vunpack.c.h.b16 %v209
  %v230 = vunpack.c.l.b16 %v210
  %v231 = vunpack.c.h.b16 %v210
  %v232 = vunpack.c.l.b16 %v211
  %v233 = vunpack.c.h.b16 %v211
  %v234 = vunpack.c.l.b16 %v212
  %v235 = vunpack.c.h.b16 %v212
  %v236 = vunpack.c.l.b16 %v213
  %v237 = vunpack.c.h.b16 %v213
  %v238 = vpack.c.b16 %v222, %v222
  %v239 = vpack.c.b16 %v223, %v223
  %v240 = vpack.c.b16 %v224, %v224
  %v241 = vpack.c.b16 %v225, %v225
  %v242 = vpack.c.b16 %v226, %v226
  %v243 = vpack.c.b16 %v227, %v227
  %v244 = vpack.c.b16 %v228, %v228
  %v245 = vpack.c.b16 %v229, %v229
  %v246 = vpack.c.b16 %v230, %v230
  %v247 = vpack.c.b16 %v231, %v231
  %v248 = vpack.c.b16 %v232, %v232
  %v249 = vpack.c.b16 %v233, %v233
  %v250 = vpack.c.b16 %v234, %v234
  %v251 = vpack.c.b16 %v235, %v235
  %v252 = vpack.c.b16 %v236, %v236
  %v253 = vpack.c.b16 %v237, %v237
  %270 = vst [vmem:[%s2] sm:$0xf] %v238
  %271 = vst [vmem:[%s2 + $0x4] sm:$0xf] %v239
  %272 = vst [vmem:[%s2 + $0x8] sm:$0xf] %v240
  %273 = vst [vmem:[%s2 + $0xc] sm:$0xf] %v241
  %274 = vst [vmem:[%s2 + $0x10] sm:$0xf] %v242
  %275 = vst [vmem:[%s2 + $0x14] sm:$0xf] %v243
  %276 = vst [vmem:[%s2 + $0x18] sm:$0xf] %v244
  %277 = vst [vmem:[%s2 + $0x1c] sm:$0xf] %v245
  %278 = vst [vmem:[%s2 + $0x20] sm:$0xf] %v246
  %279 = vst [vmem:[%s2 + $0x24] sm:$0xf] %v247
  %280 = vst [vmem:[%s2 + $0x28] sm:$0xf] %v248
  %281 = vst [vmem:[%s2 + $0x2c] sm:$0xf] %v249
  %282 = vst [vmem:[%s2 + $0x30] sm:$0xf] %v250
  %283 = vst [vmem:[%s2 + $0x34] sm:$0xf] %v251
  %284 = vst [vmem:[%s2 + $0x38] sm:$0xf] %v252
  %285 = vst [vmem:[%s2 + $0x3c] sm:$0xf] %v253
  // Predicated region
  $region10: #{deepgcn_forward.3} parent=0 // pred_check
    _
  $region11: #{deepgcn_forward.3} parent=0 // pred_check_branch
    %287 = sbr.rel (0) target = $region13
  $region12: #{deepgcn_forward.3} parent=0 // pred_region
    _
  $region13: #{deepgcn_forward.3} parent=0 // pred_fallthru
    _
  // Predicated region
  $region14: #{deepgcn_forward.3} parent=0 // pred_check
    _
  $region15: #{deepgcn_forward.3} parent=0 // pred_check_branch
    %289 = sbr.rel (0) target = $region17
  $region16: #{deepgcn_forward.3} parent=0 // pred_region
    _
  $region17: #{deepgcn_forward.3} parent=0 // pred_fallthru
    _

// kernel: deepgcn_forward.4
$region0: #{deepgcn_forward.4}
  #allocation0 [shape = 'u32[]', space=smem, size = 0x4, offset = 0x4, fixed_abs, tag = 'smem constant byte address 0x4 - core index']
  #allocation1 [shape = 'u32[144,128]{1,0:T(1,128)}', space=vmem, size = 0x12000, scoped, tag = 'internal scratch']
  %s0 = inlined_call_operand.vmem [shape: bf16[128,128], index: 0, kind: input, shape index: {}]
  %s1 = inlined_call_operand.vmem [shape: bf16[128,128], index: 1, kind: input, shape index: {}]
  %s2 = inlined_call_operand.vmem [shape: bf16[128,128], index: 2, kind: input, shape index: {}]
  %s3 = inlined_call_operand.vmem [shape: bf16[128,128], index: 3, kind: input, shape index: {}]
  %s4 = inlined_call_operand.vmem [shape: bf16[128,128], index: 4, kind: output, shape index: {}]
  %s5 = sld [smem:[#allocation0]]
  $region26: #{deepgcn_forward.4} parent=0
    _
  %s7 = ssub.s32 1, %s5
  %s8 = scalar_select 0, %s7, %s5
  // Predicated region
  $region2: #{deepgcn_forward.4} parent=0 // pred_check
    _
  $region3: #{deepgcn_forward.4} parent=0 // pred_check_branch
    %10 = sbr.rel (0) target = $region5
  $region4: #{deepgcn_forward.4} parent=0 // pred_region
    _
  $region5: #{deepgcn_forward.4} parent=0 // pred_fallthru
    _
  // Predicated region
  $region6: #{deepgcn_forward.4} parent=0 // pred_check
    _
  $region7: #{deepgcn_forward.4} parent=0 // pred_check_branch
    %12 = sbr.rel (0) target = $region9
  $region8: #{deepgcn_forward.4} parent=0 // pred_region
    _
  $region9: #{deepgcn_forward.4} parent=0 // pred_fallthru
    _
  // Predicated region
  $region10: #{deepgcn_forward.4} parent=0 // pred_check
    _
  $region11: #{deepgcn_forward.4} parent=0 // pred_check_branch
    %14 = sbr.rel (0) target = $region13
  $region12: #{deepgcn_forward.4} parent=0 // pred_region
    _
  $region13: #{deepgcn_forward.4} parent=0 // pred_fallthru
    _
  // Predicated region
  $region14: #{deepgcn_forward.4} parent=0 // pred_check
    _
  $region15: #{deepgcn_forward.4} parent=0 // pred_check_branch
    %16 = sbr.rel (0) target = $region17
  $region16: #{deepgcn_forward.4} parent=0 // pred_region
    _
  $region17: #{deepgcn_forward.4} parent=0 // pred_fallthru
    _
  %v18 = vld [vmem:[%s0] sm:$0xf]
  %v19 = vld [vmem:[%s0 + $0x4] sm:$0xf]
  %v20 = vld [vmem:[%s0 + $0x8] sm:$0xf]
  %v21 = vld [vmem:[%s0 + $0xc] sm:$0xf]
  %v22 = vld [vmem:[%s0 + $0x10] sm:$0xf]
  %v23 = vld [vmem:[%s0 + $0x14] sm:$0xf]
  %v24 = vld [vmem:[%s0 + $0x18] sm:$0xf]
  %v25 = vld [vmem:[%s0 + $0x1c] sm:$0xf]
  %v26 = vld [vmem:[%s0 + $0x20] sm:$0xf]
  %v27 = vld [vmem:[%s0 + $0x24] sm:$0xf]
  %v28 = vld [vmem:[%s0 + $0x28] sm:$0xf]
  %v29 = vld [vmem:[%s0 + $0x2c] sm:$0xf]
  %v30 = vld [vmem:[%s0 + $0x30] sm:$0xf]
  %v31 = vld [vmem:[%s0 + $0x34] sm:$0xf]
  %v32 = vld [vmem:[%s0 + $0x38] sm:$0xf]
  %v33 = vld [vmem:[%s0 + $0x3c] sm:$0xf]
  %v34 = vlaneseq
  %v35 = vand.u32 %v34, 127
  %v36 = vld [vmem:[%s1] sm:$0xf]
  %v37 = vld [vmem:[%s1 + $0x4] sm:$0xf]
  %v38 = vld [vmem:[%s1 + $0x8] sm:$0xf]
  %v39 = vld [vmem:[%s1 + $0xc] sm:$0xf]
  %v40 = vld [vmem:[%s1 + $0x10] sm:$0xf]
  %v41 = vld [vmem:[%s1 + $0x14] sm:$0xf]
  %v42 = vld [vmem:[%s1 + $0x18] sm:$0xf]
  %v43 = vld [vmem:[%s1 + $0x1c] sm:$0xf]
  %v44 = vld [vmem:[%s1 + $0x20] sm:$0xf]
  %v45 = vld [vmem:[%s1 + $0x24] sm:$0xf]
  %v46 = vld [vmem:[%s1 + $0x28] sm:$0xf]
  %v47 = vld [vmem:[%s1 + $0x2c] sm:$0xf]
  %v48 = vld [vmem:[%s1 + $0x30] sm:$0xf]
  %v49 = vld [vmem:[%s1 + $0x34] sm:$0xf]
  %v50 = vld [vmem:[%s1 + $0x38] sm:$0xf]
  %v51 = vld [vmem:[%s1 + $0x3c] sm:$0xf]
  %v68 = vunpack.c.l.b16 %v36
  %v69 = vunpack.c.l.b16 %v37
  %v70 = vunpack.c.l.b16 %v38
  %v71 = vunpack.c.l.b16 %v39
  %v72 = vunpack.c.l.b16 %v40
  %v73 = vunpack.c.l.b16 %v41
  %v74 = vunpack.c.l.b16 %v42
  %v75 = vunpack.c.l.b16 %v43
  %v76 = vunpack.c.l.b16 %v44
  %v77 = vunpack.c.l.b16 %v45
  %v78 = vunpack.c.l.b16 %v46
  %v79 = vunpack.c.l.b16 %v47
  %v80 = vunpack.c.l.b16 %v48
  %v81 = vunpack.c.l.b16 %v49
  %v82 = vunpack.c.l.b16 %v50
  %v83 = vunpack.c.l.b16 %v51
  %v84 = vpack.c.b16 %v69, %v68
  %v85 = vpack.c.b16 %v71, %v70
  %v86 = vpack.c.b16 %v73, %v72
  %v87 = vpack.c.b16 %v75, %v74
  %v88 = vpack.c.b16 %v77, %v76
  %v89 = vpack.c.b16 %v79, %v78
  %v90 = vpack.c.b16 %v81, %v80
  %v91 = vpack.c.b16 %v83, %v82
  %v116 = vunpack.c.l.b16 %v18
  %v117 = vunpack.c.l.b16 %v19
  %v118 = vunpack.c.l.b16 %v20
  %v119 = vunpack.c.l.b16 %v21
  %v120 = vunpack.c.l.b16 %v22
  %v121 = vunpack.c.l.b16 %v23
  %v122 = vunpack.c.l.b16 %v24
  %v123 = vunpack.c.l.b16 %v25
  %v124 = vunpack.c.l.b16 %v26
  %v125 = vunpack.c.l.b16 %v27
  %v126 = vunpack.c.l.b16 %v28
  %v127 = vunpack.c.l.b16 %v29
  %v128 = vunpack.c.l.b16 %v30
  %v129 = vunpack.c.l.b16 %v31
  %v130 = vunpack.c.l.b16 %v32
  %v131 = vunpack.c.l.b16 %v33
  %v132 = vpack.c.b16 %v117, %v116
  %v133 = vpack.c.b16 %v119, %v118
  %v134 = vpack.c.b16 %v121, %v120
  %v135 = vpack.c.b16 %v123, %v122
  %v136 = vpack.c.b16 %v125, %v124
  %v137 = vpack.c.b16 %v127, %v126
  %v138 = vpack.c.b16 %v129, %v128
  %v139 = vpack.c.b16 %v131, %v130
  %148 = vmatprep.subr.bf16.mxu0 0
  %149 = vmatpush1.bf16.msra.mxu0 %v139
  %150 = vmatprep.subr.bf16.mxu0 0
  %151 = vmatpush1.bf16.msra.mxu0 %v138
  %152 = vmatprep.subr.bf16.mxu0 0
  %153 = vmatpush1.bf16.msra.mxu0 %v137
  %154 = vmatprep.subr.bf16.mxu0 0
  %155 = vmatpush1.bf16.msra.mxu0 %v136
  %156 = vmatprep.subr.bf16.mxu0 0
  %157 = vmatpush1.bf16.msra.mxu0 %v135
  %158 = vmatprep.subr.bf16.mxu0 0
  %159 = vmatpush1.bf16.msra.mxu0 %v134
  %160 = vmatprep.subr.bf16.mxu0 0
  %161 = vmatpush1.bf16.msra.mxu0 %v133
  %162 = vmatprep.subr.bf16.mxu0 0
  %163 = vmatpush1.bf16.msra.mxu0 %v132
  %164 = vmatprep.subr.bf16.mxu0 0
  %165 = vmatpush2.bf16.msra.mxu0 0
  %166 = vmatprep.subr.bf16.mxu0 0
  %167 = vmatpush2.bf16.msra.mxu0 0
  %168 = vmatprep.subr.bf16.mxu0 0
  %169 = vmatpush2.bf16.msra.mxu0 0
  %170 = vmatprep.subr.bf16.mxu0 0
  %171 = vmatpush2.bf16.msra.mxu0 0
  %172 = vmatprep.subr.bf16.mxu0 0
  %173 = vmatpush2.bf16.msra.mxu0 0
  %174 = vmatprep.subr.bf16.mxu0 0
  %175 = vmatpush2.bf16.msra.mxu0 0
  %176 = vmatprep.subr.bf16.mxu0 0
  %177 = vmatpush2.bf16.msra.mxu0 0
  %178 = vmatprep.subr.bf16.mxu0 0
  %179 = vmatpush2.bf16.msra.mxu0 0
  %180 = vmatprep.mubr.bf16.mxu0 0
  %181 = vmatmul.mubr.bf16.gmra.mxu0 %v84
  %v182 = vpop.f32.mrf.mxu0
  %v183 = vadd.f32 0.0, %v182
  %v184 = vpop.f32.mrf.mxu0
  %v185 = vpop.f32.mrf.mxu0
  %v186 = vadd.f32 0.0, %v185
  %v187 = vpop.f32.mrf.mxu0
  %188 = vmatprep.mubr.bf16.mxu0 0
  %189 = vmatmul.mubr.bf16.gmra.mxu0 %v85
  %v190 = vpop.f32.mrf.mxu0
  %v191 = vadd.f32 0.0, %v190
  %v192 = vpop.f32.mrf.mxu0
  %v193 = vpop.f32.mrf.mxu0
  %v194 = vadd.f32 0.0, %v193
  %v195 = vpop.f32.mrf.mxu0
  %196 = vmatprep.mubr.bf16.mxu0 0
  %197 = vmatmul.mubr.bf16.gmra.mxu0 %v86
  %v198 = vpop.f32.mrf.mxu0
  %v199 = vadd.f32 0.0, %v198
  %v200 = vpop.f32.mrf.mxu0
  %v201 = vpop.f32.mrf.mxu0
  %v202 = vadd.f32 0.0, %v201
  %v203 = vpop.f32.mrf.mxu0
  %204 = vmatprep.mubr.bf16.mxu0 0
  %205 = vmatmul.mubr.bf16.gmra.mxu0 %v87
  %v206 = vpop.f32.mrf.mxu0
  %v207 = vadd.f32 0.0, %v206
  %v208 = vpop.f32.mrf.mxu0
  %v209 = vpop.f32.mrf.mxu0
  %v210 = vadd.f32 0.0, %v209
  %v211 = vpop.f32.mrf.mxu0
  %212 = vmatprep.mubr.bf16.mxu0 0
  %213 = vmatmul.mubr.bf16.gmra.mxu0 %v88
  %v214 = vpop.f32.mrf.mxu0
  %v215 = vadd.f32 0.0, %v214
  %v216 = vpop.f32.mrf.mxu0
  %v217 = vpop.f32.mrf.mxu0
  %v218 = vadd.f32 0.0, %v217
  %v219 = vpop.f32.mrf.mxu0
  %220 = vmatprep.mubr.bf16.mxu0 0
  %221 = vmatmul.mubr.bf16.gmra.mxu0 %v89
  %v222 = vpop.f32.mrf.mxu0
  %v223 = vadd.f32 0.0, %v222
  %v224 = vpop.f32.mrf.mxu0
  %v225 = vpop.f32.mrf.mxu0
  %v226 = vadd.f32 0.0, %v225
  %v227 = vpop.f32.mrf.mxu0
  %228 = vmatprep.mubr.bf16.mxu0 0
  %229 = vmatmul.mubr.bf16.gmra.mxu0 %v90
  %v230 = vpop.f32.mrf.mxu0
  %v231 = vadd.f32 0.0, %v230
  %v232 = vpop.f32.mrf.mxu0
  %v233 = vpop.f32.mrf.mxu0
  %v234 = vadd.f32 0.0, %v233
  %v235 = vpop.f32.mrf.mxu0
  %236 = vmatprep.mubr.bf16.mxu0 0
  %237 = vmatmul.mubr.bf16.gmra.mxu0 %v91
  %v238 = vpop.f32.mrf.mxu0
  %v239 = vadd.f32 0.0, %v238
  %v240 = vpop.f32.mrf.mxu0
  %v241 = vpop.f32.mrf.mxu0
  %v242 = vadd.f32 0.0, %v241
  %v243 = vpop.f32.mrf.mxu0
  %244 = vdwg.mxu0
  %v245 = vmax.f32 %v183, 0.0
  %v246 = vmax.f32 %v186, 0.0
  %v247 = vmax.f32 %v191, 0.0
  %v248 = vmax.f32 %v194, 0.0
  %v249 = vmax.f32 %v199, 0.0
  %v250 = vmax.f32 %v202, 0.0
  %v251 = vmax.f32 %v207, 0.0
  %v252 = vmax.f32 %v210, 0.0
  %v253 = vmax.f32 %v215, 0.0
  %v254 = vmax.f32 %v218, 0.0
  %v255 = vmax.f32 %v223, 0.0
  %v256 = vmax.f32 %v226, 0.0
  %v257 = vmax.f32 %v231, 0.0
  %v258 = vmax.f32 %v234, 0.0
  %v259 = vmax.f32 %v239, 0.0
  %v260 = vmax.f32 %v242, 0.0
  %vm261 = vcmp.ge.s32.totalorder %v35, 0
  %vm262 = vcmp.lt.s32.totalorder %v35, 32
  %vm263 = vmand %vm261, %vm262
  %v264 = vsel %vm263, 1.0, 0.0
  %v265 = vmul.f32 %v245, %v264
  %v266 = vmul.f32 %v246, %v264
  %v267 = vmul.f32 %v247, %v264
  %v268 = vmul.f32 %v248, %v264
  %v269 = vmul.f32 %v249, %v264
  %v270 = vmul.f32 %v250, %v264
  %v271 = vmul.f32 %v251, %v264
  %v272 = vmul.f32 %v252, %v264
  %v273 = vmul.f32 %v253, %v264
  %v274 = vmul.f32 %v254, %v264
  %v275 = vmul.f32 %v255, %v264
  %v276 = vmul.f32 %v256, %v264
  %v277 = vmul.f32 %v257, %v264
  %v278 = vmul.f32 %v258, %v264
  %v279 = vmul.f32 %v259, %v264
  %v280 = vmul.f32 %v260, %v264
  %v281 = vld [vmem:[%s2] sm:$0xf]
  %v282 = vld [vmem:[%s2 + $0x4] sm:$0xf]
  %v283 = vld [vmem:[%s2 + $0x8] sm:$0xf]
  %v284 = vld [vmem:[%s2 + $0xc] sm:$0xf]
  %v285 = vld [vmem:[%s2 + $0x10] sm:$0xf]
  %v286 = vld [vmem:[%s2 + $0x14] sm:$0xf]
  %v287 = vld [vmem:[%s2 + $0x18] sm:$0xf]
  %v288 = vld [vmem:[%s2 + $0x1c] sm:$0xf]
  %v289 = vld [vmem:[%s2 + $0x20] sm:$0xf]
  %v290 = vld [vmem:[%s2 + $0x24] sm:$0xf]
  %v291 = vld [vmem:[%s2 + $0x28] sm:$0xf]
  %v292 = vld [vmem:[%s2 + $0x2c] sm:$0xf]
  %v293 = vld [vmem:[%s2 + $0x30] sm:$0xf]
  %v294 = vld [vmem:[%s2 + $0x34] sm:$0xf]
  %v295 = vld [vmem:[%s2 + $0x38] sm:$0xf]
  %v296 = vld [vmem:[%s2 + $0x3c] sm:$0xf]
  %v313 = vunpack.c.l.b16 %v281
  %v314 = vunpack.c.l.b16 %v282
  %v315 = vunpack.c.l.b16 %v283
  %v316 = vunpack.c.l.b16 %v284
  %v317 = vunpack.c.l.b16 %v285
  %v318 = vunpack.c.l.b16 %v286
  %v319 = vunpack.c.l.b16 %v287
  %v320 = vunpack.c.l.b16 %v288
  %v321 = vunpack.c.l.b16 %v289
  %v322 = vunpack.c.l.b16 %v290
  %v323 = vunpack.c.l.b16 %v291
  %v324 = vunpack.c.l.b16 %v292
  %v325 = vunpack.c.l.b16 %v293
  %v326 = vunpack.c.l.b16 %v294
  %v327 = vunpack.c.l.b16 %v295
  %v328 = vunpack.c.l.b16 %v296
  %v329 = vpack.c.b16 %v314, %v313
  %v330 = vpack.c.b16 %v316, %v315
  %v331 = vpack.c.b16 %v318, %v317
  %v332 = vpack.c.b16 %v320, %v319
  %v333 = vpack.c.b16 %v322, %v321
  %v334 = vpack.c.b16 %v324, %v323
  %v335 = vpack.c.b16 %v326, %v325
  %v336 = vpack.c.b16 %v328, %v327
  %345 = vmatprep.subr.bf16.mxu0 0
  %346 = vmatpush1.bf16.msra.mxu0 %v139
  %347 = vmatprep.subr.bf16.mxu0 0
  %348 = vmatpush1.bf16.msra.mxu0 %v138
  %349 = vmatprep.subr.bf16.mxu0 0
  %350 = vmatpush1.bf16.msra.mxu0 %v137
  %351 = vmatprep.subr.bf16.mxu0 0
  %352 = vmatpush1.bf16.msra.mxu0 %v136
  %353 = vmatprep.subr.bf16.mxu0 0
  %354 = vmatpush1.bf16.msra.mxu0 %v135
  %355 = vmatprep.subr.bf16.mxu0 0
  %356 = vmatpush1.bf16.msra.mxu0 %v134
  %357 = vmatprep.subr.bf16.mxu0 0
  %358 = vmatpush1.bf16.msra.mxu0 %v133
  %359 = vmatprep.subr.bf16.mxu0 0
  %360 = vmatpush1.bf16.msra.mxu0 %v132
  %361 = vmatprep.subr.bf16.mxu0 0
  %362 = vmatpush2.bf16.msra.mxu0 0
  %363 = vmatprep.subr.bf16.mxu0 0
  %364 = vmatpush2.bf16.msra.mxu0 0
  %365 = vmatprep.subr.bf16.mxu0 0
  %366 = vmatpush2.bf16.msra.mxu0 0
  %367 = vmatprep.subr.bf16.mxu0 0
  %368 = vmatpush2.bf16.msra.mxu0 0
  %369 = vmatprep.subr.bf16.mxu0 0
  %370 = vmatpush2.bf16.msra.mxu0 0
  %371 = vmatprep.subr.bf16.mxu0 0
  %372 = vmatpush2.bf16.msra.mxu0 0
  %373 = vmatprep.subr.bf16.mxu0 0
  %374 = vmatpush2.bf16.msra.mxu0 0
  %375 = vmatprep.subr.bf16.mxu0 0
  %376 = vmatpush2.bf16.msra.mxu0 0
  %377 = vmatprep.mubr.bf16.mxu0 0
  %378 = vmatmul.mubr.bf16.gmra.mxu0 %v329
  %v379 = vpop.f32.mrf.mxu0
  %v380 = vadd.f32 0.0, %v379
  %v381 = vpop.f32.mrf.mxu0
  %v382 = vpop.f32.mrf.mxu0
  %v383 = vadd.f32 0.0, %v382
  %v384 = vpop.f32.mrf.mxu0
  %385 = vmatprep.mubr.bf16.mxu0 0
  %386 = vmatmul.mubr.bf16.gmra.mxu0 %v330
  %v387 = vpop.f32.mrf.mxu0
  %v388 = vadd.f32 0.0, %v387
  %v389 = vpop.f32.mrf.mxu0
  %v390 = vpop.f32.mrf.mxu0
  %v391 = vadd.f32 0.0, %v390
  %v392 = vpop.f32.mrf.mxu0
  %393 = vmatprep.mubr.bf16.mxu0 0
  %394 = vmatmul.mubr.bf16.gmra.mxu0 %v331
  %v395 = vpop.f32.mrf.mxu0
  %v396 = vadd.f32 0.0, %v395
  %v397 = vpop.f32.mrf.mxu0
  %v398 = vpop.f32.mrf.mxu0
  %v399 = vadd.f32 0.0, %v398
  %v400 = vpop.f32.mrf.mxu0
  %401 = vmatprep.mubr.bf16.mxu0 0
  %402 = vmatmul.mubr.bf16.gmra.mxu0 %v332
  %v403 = vpop.f32.mrf.mxu0
  %v404 = vadd.f32 0.0, %v403
  %v405 = vpop.f32.mrf.mxu0
  %v406 = vpop.f32.mrf.mxu0
  %v407 = vadd.f32 0.0, %v406
  %v408 = vpop.f32.mrf.mxu0
  %409 = vmatprep.mubr.bf16.mxu0 0
  %410 = vmatmul.mubr.bf16.gmra.mxu0 %v333
  %v411 = vpop.f32.mrf.mxu0
  %v412 = vadd.f32 0.0, %v411
  %v413 = vpop.f32.mrf.mxu0
  %v414 = vpop.f32.mrf.mxu0
  %v415 = vadd.f32 0.0, %v414
  %v416 = vpop.f32.mrf.mxu0
  %417 = vmatprep.mubr.bf16.mxu0 0
  %418 = vmatmul.mubr.bf16.gmra.mxu0 %v334
  %v419 = vpop.f32.mrf.mxu0
  %v420 = vadd.f32 0.0, %v419
  %v421 = vpop.f32.mrf.mxu0
  %v422 = vpop.f32.mrf.mxu0
  %v423 = vadd.f32 0.0, %v422
  %v424 = vpop.f32.mrf.mxu0
  %425 = vmatprep.mubr.bf16.mxu0 0
  %426 = vmatmul.mubr.bf16.gmra.mxu0 %v335
  %v427 = vpop.f32.mrf.mxu0
  %v428 = vadd.f32 0.0, %v427
  %v429 = vpop.f32.mrf.mxu0
  %v430 = vpop.f32.mrf.mxu0
  %v431 = vadd.f32 0.0, %v430
  %v432 = vpop.f32.mrf.mxu0
  %433 = vmatprep.mubr.bf16.mxu0 0
  %434 = vmatmul.mubr.bf16.gmra.mxu0 %v336
  %v435 = vpop.f32.mrf.mxu0
  %v436 = vadd.f32 0.0, %v435
  %v437 = vpop.f32.mrf.mxu0
  %v438 = vpop.f32.mrf.mxu0
  %v439 = vadd.f32 0.0, %v438
  %v440 = vpop.f32.mrf.mxu0
  %441 = vdwg.mxu0
  %v442 = vmax.f32 %v380, 0.0
  %v443 = vmax.f32 %v383, 0.0
  %v444 = vmax.f32 %v388, 0.0
  %v445 = vmax.f32 %v391, 0.0
  %v446 = vmax.f32 %v396, 0.0
  %v447 = vmax.f32 %v399, 0.0
  %v448 = vmax.f32 %v404, 0.0
  %v449 = vmax.f32 %v407, 0.0
  %v450 = vmax.f32 %v412, 0.0
  %v451 = vmax.f32 %v415, 0.0
  %v452 = vmax.f32 %v420, 0.0
  %v453 = vmax.f32 %v423, 0.0
  %v454 = vmax.f32 %v428, 0.0
  %v455 = vmax.f32 %v431, 0.0
  %v456 = vmax.f32 %v436, 0.0
  %v457 = vmax.f32 %v439, 0.0
  %vm458 = vcmp.ge.s32.totalorder %v35, 32
  %vm459 = vcmp.lt.s32.totalorder %v35, 64
  %vm460 = vmand %vm458, %vm459
  %v461 = vsel %vm460, 1.0, 0.0
  %v462 = vmul.f32 %v442, %v461
  %v463 = vmul.f32 %v443, %v461
  %v464 = vmul.f32 %v444, %v461
  %v465 = vmul.f32 %v445, %v461
  %v466 = vmul.f32 %v446, %v461
  %v467 = vmul.f32 %v447, %v461
  %v468 = vmul.f32 %v448, %v461
  %v469 = vmul.f32 %v449, %v461
  %v470 = vmul.f32 %v450, %v461
  %v471 = vmul.f32 %v451, %v461
  %v472 = vmul.f32 %v452, %v461
  %v473 = vmul.f32 %v453, %v461
  %v474 = vmul.f32 %v454, %v461
  %v475 = vmul.f32 %v455, %v461
  %v476 = vmul.f32 %v456, %v461
  %v477 = vmul.f32 %v457, %v461
  %v478 = vadd.f32 %v265, %v462
  %v479 = vadd.f32 %v266, %v463
  %v480 = vadd.f32 %v267, %v464
  %v481 = vadd.f32 %v268, %v465
  %v482 = vadd.f32 %v269, %v466
  %v483 = vadd.f32 %v270, %v467
  %v484 = vadd.f32 %v271, %v468
  %v485 = vadd.f32 %v272, %v469
  %v486 = vadd.f32 %v273, %v470
  %v487 = vadd.f32 %v274, %v471
  %v488 = vadd.f32 %v275, %v472
  %v489 = vadd.f32 %v276, %v473
  %v490 = vadd.f32 %v277, %v474
  %v491 = vadd.f32 %v278, %v475
  %v492 = vadd.f32 %v279, %v476
  %v493 = vadd.f32 %v280, %v477
  %v494 = vld [vmem:[%s3] sm:$0xf]
  %v495 = vld [vmem:[%s3 + $0x4] sm:$0xf]
  %v496 = vld [vmem:[%s3 + $0x8] sm:$0xf]
  %v497 = vld [vmem:[%s3 + $0xc] sm:$0xf]
  %v498 = vld [vmem:[%s3 + $0x10] sm:$0xf]
  %v499 = vld [vmem:[%s3 + $0x14] sm:$0xf]
  %v500 = vld [vmem:[%s3 + $0x18] sm:$0xf]
  %v501 = vld [vmem:[%s3 + $0x1c] sm:$0xf]
  %v502 = vld [vmem:[%s3 + $0x20] sm:$0xf]
  %v503 = vld [vmem:[%s3 + $0x24] sm:$0xf]
  %v504 = vld [vmem:[%s3 + $0x28] sm:$0xf]
  %v505 = vld [vmem:[%s3 + $0x2c] sm:$0xf]
  %v506 = vld [vmem:[%s3 + $0x30] sm:$0xf]
  %v507 = vld [vmem:[%s3 + $0x34] sm:$0xf]
  %v508 = vld [vmem:[%s3 + $0x38] sm:$0xf]
  %v509 = vld [vmem:[%s3 + $0x3c] sm:$0xf]
  %v526 = vunpack.c.l.b16 %v494
  %v527 = vunpack.c.l.b16 %v495
  %v528 = vunpack.c.l.b16 %v496
  %v529 = vunpack.c.l.b16 %v497
  %v530 = vunpack.c.l.b16 %v498
  %v531 = vunpack.c.l.b16 %v499
  %v532 = vunpack.c.l.b16 %v500
  %v533 = vunpack.c.l.b16 %v501
  %v534 = vunpack.c.l.b16 %v502
  %v535 = vunpack.c.l.b16 %v503
  %v536 = vunpack.c.l.b16 %v504
  %v537 = vunpack.c.l.b16 %v505
  %v538 = vunpack.c.l.b16 %v506
  %v539 = vunpack.c.l.b16 %v507
  %v540 = vunpack.c.l.b16 %v508
  %v541 = vunpack.c.l.b16 %v509
  %v542 = vpack.c.b16 %v527, %v526
  %v543 = vpack.c.b16 %v529, %v528
  %v544 = vpack.c.b16 %v531, %v530
  %v545 = vpack.c.b16 %v533, %v532
  %v546 = vpack.c.b16 %v535, %v534
  %v547 = vpack.c.b16 %v537, %v536
  %v548 = vpack.c.b16 %v539, %v538
  %v549 = vpack.c.b16 %v541, %v540
  %558 = vmatprep.subr.bf16.mxu0 0
  %559 = vmatpush1.bf16.msra.mxu0 %v139
  %560 = vmatprep.subr.bf16.mxu0 0
  %561 = vmatpush1.bf16.msra.mxu0 %v138
  %562 = vmatprep.subr.bf16.mxu0 0
  %563 = vmatpush1.bf16.msra.mxu0 %v137
  %564 = vmatprep.subr.bf16.mxu0 0
  %565 = vmatpush1.bf16.msra.mxu0 %v136
  %566 = vmatprep.subr.bf16.mxu0 0
  %567 = vmatpush1.bf16.msra.mxu0 %v135
  %568 = vmatprep.subr.bf16.mxu0 0
  %569 = vmatpush1.bf16.msra.mxu0 %v134
  %570 = vmatprep.subr.bf16.mxu0 0
  %571 = vmatpush1.bf16.msra.mxu0 %v133
  %572 = vmatprep.subr.bf16.mxu0 0
  %573 = vmatpush1.bf16.msra.mxu0 %v132
  %574 = vmatprep.subr.bf16.mxu0 0
  %575 = vmatpush2.bf16.msra.mxu0 0
  %576 = vmatprep.subr.bf16.mxu0 0
  %577 = vmatpush2.bf16.msra.mxu0 0
  %578 = vmatprep.subr.bf16.mxu0 0
  %579 = vmatpush2.bf16.msra.mxu0 0
  %580 = vmatprep.subr.bf16.mxu0 0
  %581 = vmatpush2.bf16.msra.mxu0 0
  %582 = vmatprep.subr.bf16.mxu0 0
  %583 = vmatpush2.bf16.msra.mxu0 0
  %584 = vmatprep.subr.bf16.mxu0 0
  %585 = vmatpush2.bf16.msra.mxu0 0
  %586 = vmatprep.subr.bf16.mxu0 0
  %587 = vmatpush2.bf16.msra.mxu0 0
  %588 = vmatprep.subr.bf16.mxu0 0
  %589 = vmatpush2.bf16.msra.mxu0 0
  %590 = vmatprep.mubr.bf16.mxu0 0
  %591 = vmatmul.mubr.bf16.gmra.mxu0 %v542
  %v592 = vpop.f32.mrf.mxu0
  %v593 = vadd.f32 0.0, %v592
  %v594 = vpop.f32.mrf.mxu0
  %v595 = vpop.f32.mrf.mxu0
  %v596 = vadd.f32 0.0, %v595
  %v597 = vpop.f32.mrf.mxu0
  %598 = vmatprep.mubr.bf16.mxu0 0
  %599 = vmatmul.mubr.bf16.gmra.mxu0 %v543
  %v600 = vpop.f32.mrf.mxu0
  %v601 = vadd.f32 0.0, %v600
  %v602 = vpop.f32.mrf.mxu0
  %v603 = vpop.f32.mrf.mxu0
  %v604 = vadd.f32 0.0, %v603
  %v605 = vpop.f32.mrf.mxu0
  %606 = vmatprep.mubr.bf16.mxu0 0
  %607 = vmatmul.mubr.bf16.gmra.mxu0 %v544
  %v608 = vpop.f32.mrf.mxu0
  %v609 = vadd.f32 0.0, %v608
  %v610 = vpop.f32.mrf.mxu0
  %v611 = vpop.f32.mrf.mxu0
  %v612 = vadd.f32 0.0, %v611
  %v613 = vpop.f32.mrf.mxu0
  %614 = vmatprep.mubr.bf16.mxu0 0
  %615 = vmatmul.mubr.bf16.gmra.mxu0 %v545
  %v616 = vpop.f32.mrf.mxu0
  %v617 = vadd.f32 0.0, %v616
  %v618 = vpop.f32.mrf.mxu0
  %v619 = vpop.f32.mrf.mxu0
  %v620 = vadd.f32 0.0, %v619
  %v621 = vpop.f32.mrf.mxu0
  %622 = vmatprep.mubr.bf16.mxu0 0
  %623 = vmatmul.mubr.bf16.gmra.mxu0 %v546
  %v624 = vpop.f32.mrf.mxu0
  %v625 = vadd.f32 0.0, %v624
  %v626 = vpop.f32.mrf.mxu0
  %v627 = vpop.f32.mrf.mxu0
  %v628 = vadd.f32 0.0, %v627
  %v629 = vpop.f32.mrf.mxu0
  %630 = vmatprep.mubr.bf16.mxu0 0
  %631 = vmatmul.mubr.bf16.gmra.mxu0 %v547
  %v632 = vpop.f32.mrf.mxu0
  %v633 = vadd.f32 0.0, %v632
  %v634 = vpop.f32.mrf.mxu0
  %v635 = vpop.f32.mrf.mxu0
  %v636 = vadd.f32 0.0, %v635
  %v637 = vpop.f32.mrf.mxu0
  %638 = vmatprep.mubr.bf16.mxu0 0
  %639 = vmatmul.mubr.bf16.gmra.mxu0 %v548
  %v640 = vpop.f32.mrf.mxu0
  %v641 = vadd.f32 0.0, %v640
  %v642 = vpop.f32.mrf.mxu0
  %v643 = vpop.f32.mrf.mxu0
  %v644 = vadd.f32 0.0, %v643
  %v645 = vpop.f32.mrf.mxu0
  %646 = vmatprep.mubr.bf16.mxu0 0
  %647 = vmatmul.mubr.bf16.gmra.mxu0 %v549
  %v648 = vpop.f32.mrf.mxu0
  %v649 = vadd.f32 0.0, %v648
  %v650 = vpop.f32.mrf.mxu0
  %v651 = vpop.f32.mrf.mxu0
  %v652 = vadd.f32 0.0, %v651
  %v653 = vpop.f32.mrf.mxu0
  %654 = vdwg.mxu0
  %v655 = vmax.f32 %v593, 0.0
  %v656 = vmax.f32 %v596, 0.0
  %v657 = vmax.f32 %v601, 0.0
  %v658 = vmax.f32 %v604, 0.0
  %v659 = vmax.f32 %v609, 0.0
  %v660 = vmax.f32 %v612, 0.0
  %v661 = vmax.f32 %v617, 0.0
  %v662 = vmax.f32 %v620, 0.0
  %v663 = vmax.f32 %v625, 0.0
  %v664 = vmax.f32 %v628, 0.0
  %v665 = vmax.f32 %v633, 0.0
  %v666 = vmax.f32 %v636, 0.0
  %v667 = vmax.f32 %v641, 0.0
  %v668 = vmax.f32 %v644, 0.0
  %v669 = vmax.f32 %v649, 0.0
  %v670 = vmax.f32 %v652, 0.0
  %vm671 = vcmp.ge.s32.totalorder %v35, 64
  %vm672 = vcmp.lt.s32.totalorder %v35, 96
  %vm673 = vmand %vm671, %vm672
  %v674 = vsel %vm673, 1.0, 0.0
  %v675 = vmul.f32 %v655, %v674
  %v676 = vmul.f32 %v656, %v674
  %v677 = vmul.f32 %v657, %v674
  %v678 = vmul.f32 %v658, %v674
  %v679 = vmul.f32 %v659, %v674
  %v680 = vmul.f32 %v660, %v674
  %v681 = vmul.f32 %v661, %v674
  %v682 = vmul.f32 %v662, %v674
  %v683 = vmul.f32 %v663, %v674
  %v684 = vmul.f32 %v664, %v674
  %v685 = vmul.f32 %v665, %v674
  %v686 = vmul.f32 %v666, %v674
  %v687 = vmul.f32 %v667, %v674
  %v688 = vmul.f32 %v668, %v674
  %v689 = vmul.f32 %v669, %v674
  %v690 = vmul.f32 %v670, %v674
  %v691 = vadd.f32 %v478, %v675
  %v692 = vadd.f32 %v479, %v676
  %v693 = vadd.f32 %v480, %v677
  %v694 = vadd.f32 %v481, %v678
  %v695 = vadd.f32 %v482, %v679
  %v696 = vadd.f32 %v483, %v680
  %v697 = vadd.f32 %v484, %v681
  %v698 = vadd.f32 %v485, %v682
  %v699 = vadd.f32 %v486, %v683
  %v700 = vadd.f32 %v487, %v684
  %v701 = vadd.f32 %v488, %v685
  %v702 = vadd.f32 %v489, %v686
  %v703 = vadd.f32 %v490, %v687
  %v704 = vadd.f32 %v491, %v688
  %v705 = vadd.f32 %v492, %v689
  %v706 = vadd.f32 %v493, %v690
  %v707 = vpack.c.bf16 %v692, %v691
  %v708 = vpack.c.bf16 %v694, %v693
  %v709 = vpack.c.bf16 %v696, %v695
  %v710 = vpack.c.bf16 %v698, %v697
  %v711 = vpack.c.bf16 %v700, %v699
  %v712 = vpack.c.bf16 %v702, %v701
  %v713 = vpack.c.bf16 %v704, %v703
  %v714 = vpack.c.bf16 %v706, %v705
  %v723 = vunpack.c.l.b16 %v707
  %v724 = vunpack.c.h.b16 %v707
  %v725 = vunpack.c.l.b16 %v708
  %v726 = vunpack.c.h.b16 %v708
  %v727 = vunpack.c.l.b16 %v709
  %v728 = vunpack.c.h.b16 %v709
  %v729 = vunpack.c.l.b16 %v710
  %v730 = vunpack.c.h.b16 %v710
  %v731 = vunpack.c.l.b16 %v711
  %v732 = vunpack.c.h.b16 %v711
  %v733 = vunpack.c.l.b16 %v712
  %v734 = vunpack.c.h.b16 %v712
  %v735 = vunpack.c.l.b16 %v713
  %v736 = vunpack.c.h.b16 %v713
  %v737 = vunpack.c.l.b16 %v714
  %v738 = vunpack.c.h.b16 %v714
  %v739 = vpack.c.b16 %v723, %v723
  %v740 = vpack.c.b16 %v724, %v724
  %v741 = vpack.c.b16 %v725, %v725
  %v742 = vpack.c.b16 %v726, %v726
  %v743 = vpack.c.b16 %v727, %v727
  %v744 = vpack.c.b16 %v728, %v728
  %v745 = vpack.c.b16 %v729, %v729
  %v746 = vpack.c.b16 %v730, %v730
  %v747 = vpack.c.b16 %v731, %v731
  %v748 = vpack.c.b16 %v732, %v732
  %v749 = vpack.c.b16 %v733, %v733
  %v750 = vpack.c.b16 %v734, %v734
  %v751 = vpack.c.b16 %v735, %v735
  %v752 = vpack.c.b16 %v736, %v736
  %v753 = vpack.c.b16 %v737, %v737
  %v754 = vpack.c.b16 %v738, %v738
  %771 = vst [vmem:[%s4] sm:$0xf] %v739
  %772 = vst [vmem:[%s4 + $0x4] sm:$0xf] %v740
  %773 = vst [vmem:[%s4 + $0x8] sm:$0xf] %v741
  %774 = vst [vmem:[%s4 + $0xc] sm:$0xf] %v742
  %775 = vst [vmem:[%s4 + $0x10] sm:$0xf] %v743
  %776 = vst [vmem:[%s4 + $0x14] sm:$0xf] %v744
  %777 = vst [vmem:[%s4 + $0x18] sm:$0xf] %v745
  %778 = vst [vmem:[%s4 + $0x1c] sm:$0xf] %v746
  %779 = vst [vmem:[%s4 + $0x20] sm:$0xf] %v747
  %780 = vst [vmem:[%s4 + $0x24] sm:$0xf] %v748
  %781 = vst [vmem:[%s4 + $0x28] sm:$0xf] %v749
  %782 = vst [vmem:[%s4 + $0x2c] sm:$0xf] %v750
  %783 = vst [vmem:[%s4 + $0x30] sm:$0xf] %v751
  %784 = vst [vmem:[%s4 + $0x34] sm:$0xf] %v752
  %785 = vst [vmem:[%s4 + $0x38] sm:$0xf] %v753
  %786 = vst [vmem:[%s4 + $0x3c] sm:$0xf] %v754
  // Predicated region
  $region18: #{deepgcn_forward.4} parent=0 // pred_check
    _
  $region19: #{deepgcn_forward.4} parent=0 // pred_check_branch
    %788 = sbr.rel (0) target = $region21
  $region20: #{deepgcn_forward.4} parent=0 // pred_region
    _
  $region21: #{deepgcn_forward.4} parent=0 // pred_fallthru
    _
  // Predicated region
  $region22: #{deepgcn_forward.4} parent=0 // pred_check
    _
  $region23: #{deepgcn_forward.4} parent=0 // pred_check_branch
    %790 = sbr.rel (0) target = $region25
  $region24: #{deepgcn_forward.4} parent=0 // pred_region
    _
  $region25: #{deepgcn_forward.4} parent=0 // pred_fallthru
    _

// kernel: deepgcn_forward.5
$region0: #{deepgcn_forward.5}
  #allocation0 [shape = 'u32[]', space=smem, size = 0x4, offset = 0x4, fixed_abs, tag = 'smem constant byte address 0x4 - core index']
  #allocation1 [shape = 'u32[144,128]{1,0:T(1,128)}', space=vmem, size = 0x12000, scoped, tag = 'internal scratch']
  #allocation2 [shape = 'f32[1,1]{1,0:T(1,128)S(1)}', space=vmem, size = 0x200, scoped, tag = 'scoped memory for deepgcn_forward.5']
  %s0 = inlined_call_operand.<no memory space> [shape: f32[1,1], index: 0, kind: input, shape index: {}]
  %s1 = inlined_call_operand.vmem [shape: bf16[128,128], index: 1, kind: input, shape index: {}]
  %s2 = inlined_call_operand.vmem [shape: bf16[128,128], index: 2, kind: input, shape index: {}]
  %s3 = inlined_call_operand.vmem [shape: bf16[128,128], index: 3, kind: input, shape index: {}]
  %s4 = inlined_call_operand.vmem [shape: bf16[128,128], index: 4, kind: input, shape index: {}]
  %s5 = inlined_call_operand.vmem [shape: f32[128,128], index: 5, kind: input, shape index: {}]
  %s6 = inlined_call_operand.vmem [shape: f32[1,128], index: 6, kind: input, shape index: {}]
  %s7 = inlined_call_operand.vmem [shape: f32[1,128], index: 7, kind: input, shape index: {}]
  %s8 = inlined_call_operand.vmem [shape: f32[1,128], index: 8, kind: input, shape index: {}]
  %s9 = inlined_call_operand.vmem [shape: f32[128,128], index: 9, kind: output, shape index: {}]
  %s10 = sld [smem:[#allocation0]]
  $region46: #{deepgcn_forward.5} parent=0
    _
  %s12 = ssub.s32 1, %s10
  %s13 = scalar_select 0, %s12, %s10
  %v14 = vstv %s0
  %15 = vst [vmem:[#allocation2] sm:$0x1] %v14
  // Predicated region
  $region2: #{deepgcn_forward.5} parent=0 // pred_check
    _
  $region3: #{deepgcn_forward.5} parent=0 // pred_check_branch
    %17 = sbr.rel (0) target = $region5
  $region4: #{deepgcn_forward.5} parent=0 // pred_region
    _
  $region5: #{deepgcn_forward.5} parent=0 // pred_fallthru
    _
  // Predicated region
  $region6: #{deepgcn_forward.5} parent=0 // pred_check
    _
  $region7: #{deepgcn_forward.5} parent=0 // pred_check_branch
    %19 = sbr.rel (0) target = $region9
  $region8: #{deepgcn_forward.5} parent=0 // pred_region
    _
  $region9: #{deepgcn_forward.5} parent=0 // pred_fallthru
    _
  // Predicated region
  $region10: #{deepgcn_forward.5} parent=0 // pred_check
    _
  $region11: #{deepgcn_forward.5} parent=0 // pred_check_branch
    %21 = sbr.rel (0) target = $region13
  $region12: #{deepgcn_forward.5} parent=0 // pred_region
    _
  $region13: #{deepgcn_forward.5} parent=0 // pred_fallthru
    _
  // Predicated region
  $region14: #{deepgcn_forward.5} parent=0 // pred_check
    _
  $region15: #{deepgcn_forward.5} parent=0 // pred_check_branch
    %23 = sbr.rel (0) target = $region17
  $region16: #{deepgcn_forward.5} parent=0 // pred_region
    _
  $region17: #{deepgcn_forward.5} parent=0 // pred_fallthru
    _
  // Predicated region
  $region18: #{deepgcn_forward.5} parent=0 // pred_check
    _
  $region19: #{deepgcn_forward.5} parent=0 // pred_check_branch
    %25 = sbr.rel (0) target = $region21
  $region20: #{deepgcn_forward.5} parent=0 // pred_region
    _
  $region21: #{deepgcn_forward.5} parent=0 // pred_fallthru
    _
  // Predicated region
  $region22: #{deepgcn_forward.5} parent=0 // pred_check
    _
  $region23: #{deepgcn_forward.5} parent=0 // pred_check_branch
    %27 = sbr.rel (0) target = $region25
  $region24: #{deepgcn_forward.5} parent=0 // pred_region
    _
  $region25: #{deepgcn_forward.5} parent=0 // pred_fallthru
    _
  // Predicated region
  $region26: #{deepgcn_forward.5} parent=0 // pred_check
    _
  $region27: #{deepgcn_forward.5} parent=0 // pred_check_branch
    %29 = sbr.rel (0) target = $region29
  $region28: #{deepgcn_forward.5} parent=0 // pred_region
    _
  $region29: #{deepgcn_forward.5} parent=0 // pred_fallthru
    _
  // Predicated region
  $region30: #{deepgcn_forward.5} parent=0 // pred_check
    _
  $region31: #{deepgcn_forward.5} parent=0 // pred_check_branch
    %31 = sbr.rel (0) target = $region33
  $region32: #{deepgcn_forward.5} parent=0 // pred_region
    _
  $region33: #{deepgcn_forward.5} parent=0 // pred_fallthru
    _
  // Predicated region
  $region34: #{deepgcn_forward.5} parent=0 // pred_check
    _
  $region35: #{deepgcn_forward.5} parent=0 // pred_check_branch
    %33 = sbr.rel (0) target = $region37
  $region36: #{deepgcn_forward.5} parent=0 // pred_region
    _
  $region37: #{deepgcn_forward.5} parent=0 // pred_fallthru
    _
  %v35 = vld [vmem:[%s1] sm:$0xf]
  %v36 = vld [vmem:[%s1 + $0x4] sm:$0xf]
  %v37 = vld [vmem:[%s1 + $0x8] sm:$0xf]
  %v38 = vld [vmem:[%s1 + $0xc] sm:$0xf]
  %v39 = vld [vmem:[%s1 + $0x10] sm:$0xf]
  %v40 = vld [vmem:[%s1 + $0x14] sm:$0xf]
  %v41 = vld [vmem:[%s1 + $0x18] sm:$0xf]
  %v42 = vld [vmem:[%s1 + $0x1c] sm:$0xf]
  %v43 = vld [vmem:[%s1 + $0x20] sm:$0xf]
  %v44 = vld [vmem:[%s1 + $0x24] sm:$0xf]
  %v45 = vld [vmem:[%s1 + $0x28] sm:$0xf]
  %v46 = vld [vmem:[%s1 + $0x2c] sm:$0xf]
  %v47 = vld [vmem:[%s1 + $0x30] sm:$0xf]
  %v48 = vld [vmem:[%s1 + $0x34] sm:$0xf]
  %v49 = vld [vmem:[%s1 + $0x38] sm:$0xf]
  %v50 = vld [vmem:[%s1 + $0x3c] sm:$0xf]
  %v51 = vld [vmem:[#allocation2] sm:$0x1]
  %v52 = vlaneseq
  %v53 = vand.u32 %v52, 127
  %v54 = vld [vmem:[%s2] sm:$0xf]
  %v55 = vld [vmem:[%s2 + $0x4] sm:$0xf]
  %v56 = vld [vmem:[%s2 + $0x8] sm:$0xf]
  %v57 = vld [vmem:[%s2 + $0xc] sm:$0xf]
  %v58 = vld [vmem:[%s2 + $0x10] sm:$0xf]
  %v59 = vld [vmem:[%s2 + $0x14] sm:$0xf]
  %v60 = vld [vmem:[%s2 + $0x18] sm:$0xf]
  %v61 = vld [vmem:[%s2 + $0x1c] sm:$0xf]
  %v62 = vld [vmem:[%s2 + $0x20] sm:$0xf]
  %v63 = vld [vmem:[%s2 + $0x24] sm:$0xf]
  %v64 = vld [vmem:[%s2 + $0x28] sm:$0xf]
  %v65 = vld [vmem:[%s2 + $0x2c] sm:$0xf]
  %v66 = vld [vmem:[%s2 + $0x30] sm:$0xf]
  %v67 = vld [vmem:[%s2 + $0x34] sm:$0xf]
  %v68 = vld [vmem:[%s2 + $0x38] sm:$0xf]
  %v69 = vld [vmem:[%s2 + $0x3c] sm:$0xf]
  %v86 = vunpack.c.l.b16 %v54
  %v87 = vunpack.c.l.b16 %v55
  %v88 = vunpack.c.l.b16 %v56
  %v89 = vunpack.c.l.b16 %v57
  %v90 = vunpack.c.l.b16 %v58
  %v91 = vunpack.c.l.b16 %v59
  %v92 = vunpack.c.l.b16 %v60
  %v93 = vunpack.c.l.b16 %v61
  %v94 = vunpack.c.l.b16 %v62
  %v95 = vunpack.c.l.b16 %v63
  %v96 = vunpack.c.l.b16 %v64
  %v97 = vunpack.c.l.b16 %v65
  %v98 = vunpack.c.l.b16 %v66
  %v99 = vunpack.c.l.b16 %v67
  %v100 = vunpack.c.l.b16 %v68
  %v101 = vunpack.c.l.b16 %v69
  %v102 = vpack.c.b16 %v87, %v86
  %v103 = vpack.c.b16 %v89, %v88
  %v104 = vpack.c.b16 %v91, %v90
  %v105 = vpack.c.b16 %v93, %v92
  %v106 = vpack.c.b16 %v95, %v94
  %v107 = vpack.c.b16 %v97, %v96
  %v108 = vpack.c.b16 %v99, %v98
  %v109 = vpack.c.b16 %v101, %v100
  %v134 = vunpack.c.l.b16 %v35
  %v135 = vunpack.c.l.b16 %v36
  %v136 = vunpack.c.l.b16 %v37
  %v137 = vunpack.c.l.b16 %v38
  %v138 = vunpack.c.l.b16 %v39
  %v139 = vunpack.c.l.b16 %v40
  %v140 = vunpack.c.l.b16 %v41
  %v141 = vunpack.c.l.b16 %v42
  %v142 = vunpack.c.l.b16 %v43
  %v143 = vunpack.c.l.b16 %v44
  %v144 = vunpack.c.l.b16 %v45
  %v145 = vunpack.c.l.b16 %v46
  %v146 = vunpack.c.l.b16 %v47
  %v147 = vunpack.c.l.b16 %v48
  %v148 = vunpack.c.l.b16 %v49
  %v149 = vunpack.c.l.b16 %v50
  %v150 = vpack.c.b16 %v135, %v134
  %v151 = vpack.c.b16 %v137, %v136
  %v152 = vpack.c.b16 %v139, %v138
  %v153 = vpack.c.b16 %v141, %v140
  %v154 = vpack.c.b16 %v143, %v142
  %v155 = vpack.c.b16 %v145, %v144
  %v156 = vpack.c.b16 %v147, %v146
  %v157 = vpack.c.b16 %v149, %v148
  %166 = vmatprep.subr.bf16.mxu0 0
  %167 = vmatpush1.bf16.msra.mxu0 %v157
  %168 = vmatprep.subr.bf16.mxu0 0
  %169 = vmatpush1.bf16.msra.mxu0 %v156
  %170 = vmatprep.subr.bf16.mxu0 0
  %171 = vmatpush1.bf16.msra.mxu0 %v155
  %172 = vmatprep.subr.bf16.mxu0 0
  %173 = vmatpush1.bf16.msra.mxu0 %v154
  %174 = vmatprep.subr.bf16.mxu0 0
  %175 = vmatpush1.bf16.msra.mxu0 %v153
  %176 = vmatprep.subr.bf16.mxu0 0
  %177 = vmatpush1.bf16.msra.mxu0 %v152
  %178 = vmatprep.subr.bf16.mxu0 0
  %179 = vmatpush1.bf16.msra.mxu0 %v151
  %180 = vmatprep.subr.bf16.mxu0 0
  %181 = vmatpush1.bf16.msra.mxu0 %v150
  %182 = vmatprep.subr.bf16.mxu0 0
  %183 = vmatpush2.bf16.msra.mxu0 0
  %184 = vmatprep.subr.bf16.mxu0 0
  %185 = vmatpush2.bf16.msra.mxu0 0
  %186 = vmatprep.subr.bf16.mxu0 0
  %187 = vmatpush2.bf16.msra.mxu0 0
  %188 = vmatprep.subr.bf16.mxu0 0
  %189 = vmatpush2.bf16.msra.mxu0 0
  %190 = vmatprep.subr.bf16.mxu0 0
  %191 = vmatpush2.bf16.msra.mxu0 0
  %192 = vmatprep.subr.bf16.mxu0 0
  %193 = vmatpush2.bf16.msra.mxu0 0
  %194 = vmatprep.subr.bf16.mxu0 0
  %195 = vmatpush2.bf16.msra.mxu0 0
  %196 = vmatprep.subr.bf16.mxu0 0
  %197 = vmatpush2.bf16.msra.mxu0 0
  %198 = vmatprep.mubr.bf16.mxu0 0
  %199 = vmatmul.mubr.bf16.gmra.mxu0 %v102
  %v200 = vpop.f32.mrf.mxu0
  %v201 = vadd.f32 0.0, %v200
  %v202 = vpop.f32.mrf.mxu0
  %v203 = vpop.f32.mrf.mxu0
  %v204 = vadd.f32 0.0, %v203
  %v205 = vpop.f32.mrf.mxu0
  %206 = vmatprep.mubr.bf16.mxu0 0
  %207 = vmatmul.mubr.bf16.gmra.mxu0 %v103
  %v208 = vpop.f32.mrf.mxu0
  %v209 = vadd.f32 0.0, %v208
  %v210 = vpop.f32.mrf.mxu0
  %v211 = vpop.f32.mrf.mxu0
  %v212 = vadd.f32 0.0, %v211
  %v213 = vpop.f32.mrf.mxu0
  %214 = vmatprep.mubr.bf16.mxu0 0
  %215 = vmatmul.mubr.bf16.gmra.mxu0 %v104
  %v216 = vpop.f32.mrf.mxu0
  %v217 = vadd.f32 0.0, %v216
  %v218 = vpop.f32.mrf.mxu0
  %v219 = vpop.f32.mrf.mxu0
  %v220 = vadd.f32 0.0, %v219
  %v221 = vpop.f32.mrf.mxu0
  %222 = vmatprep.mubr.bf16.mxu0 0
  %223 = vmatmul.mubr.bf16.gmra.mxu0 %v105
  %v224 = vpop.f32.mrf.mxu0
  %v225 = vadd.f32 0.0, %v224
  %v226 = vpop.f32.mrf.mxu0
  %v227 = vpop.f32.mrf.mxu0
  %v228 = vadd.f32 0.0, %v227
  %v229 = vpop.f32.mrf.mxu0
  %230 = vmatprep.mubr.bf16.mxu0 0
  %231 = vmatmul.mubr.bf16.gmra.mxu0 %v106
  %v232 = vpop.f32.mrf.mxu0
  %v233 = vadd.f32 0.0, %v232
  %v234 = vpop.f32.mrf.mxu0
  %v235 = vpop.f32.mrf.mxu0
  %v236 = vadd.f32 0.0, %v235
  %v237 = vpop.f32.mrf.mxu0
  %238 = vmatprep.mubr.bf16.mxu0 0
  %239 = vmatmul.mubr.bf16.gmra.mxu0 %v107
  %v240 = vpop.f32.mrf.mxu0
  %v241 = vadd.f32 0.0, %v240
  %v242 = vpop.f32.mrf.mxu0
  %v243 = vpop.f32.mrf.mxu0
  %v244 = vadd.f32 0.0, %v243
  %v245 = vpop.f32.mrf.mxu0
  %246 = vmatprep.mubr.bf16.mxu0 0
  %247 = vmatmul.mubr.bf16.gmra.mxu0 %v108
  %v248 = vpop.f32.mrf.mxu0
  %v249 = vadd.f32 0.0, %v248
  %v250 = vpop.f32.mrf.mxu0
  %v251 = vpop.f32.mrf.mxu0
  %v252 = vadd.f32 0.0, %v251
  %v253 = vpop.f32.mrf.mxu0
  %254 = vmatprep.mubr.bf16.mxu0 0
  %255 = vmatmul.mubr.bf16.gmra.mxu0 %v109
  %v256 = vpop.f32.mrf.mxu0
  %v257 = vadd.f32 0.0, %v256
  %v258 = vpop.f32.mrf.mxu0
  %v259 = vpop.f32.mrf.mxu0
  %v260 = vadd.f32 0.0, %v259
  %v261 = vpop.f32.mrf.mxu0
  %262 = vdwg.mxu0
  %vm263 = vcmp.ge.s32.totalorder %v53, 0
  %vm264 = vcmp.lt.s32.totalorder %v53, 32
  %vm265 = vmand %vm263, %vm264
  %v266 = vsel %vm265, 1.0, 0.0
  %v267 = vmul.f32 %v201, %v266
  %v268 = vmul.f32 %v204, %v266
  %v269 = vmul.f32 %v209, %v266
  %v270 = vmul.f32 %v212, %v266
  %v271 = vmul.f32 %v217, %v266
  %v272 = vmul.f32 %v220, %v266
  %v273 = vmul.f32 %v225, %v266
  %v274 = vmul.f32 %v228, %v266
  %v275 = vmul.f32 %v233, %v266
  %v276 = vmul.f32 %v236, %v266
  %v277 = vmul.f32 %v241, %v266
  %v278 = vmul.f32 %v244, %v266
  %v279 = vmul.f32 %v249, %v266
  %v280 = vmul.f32 %v252, %v266
  %v281 = vmul.f32 %v257, %v266
  %v282 = vmul.f32 %v260, %v266
  %v284 = vlaneseq
  %v285 = vshrl.u32 %v284, 7
  %v286 = vsub.s32 0, %v285
  %v287 = vrot.slane %v51, %v286
  %288 = vset.pattern.permute.xlu0 0
  %289 = vperm.xlu0 %288, %v287
  %v290 = vpop.permute.xlu0 %289
  %v292 = vmul.f32 %v290, %v267
  %v293 = vmul.f32 %v290, %v268
  %v294 = vmul.f32 %v290, %v269
  %v295 = vmul.f32 %v290, %v270
  %v296 = vmul.f32 %v290, %v271
  %v297 = vmul.f32 %v290, %v272
  %v298 = vmul.f32 %v290, %v273
  %v299 = vmul.f32 %v290, %v274
  %v300 = vmul.f32 %v290, %v275
  %v301 = vmul.f32 %v290, %v276
  %v302 = vmul.f32 %v290, %v277
  %v303 = vmul.f32 %v290, %v278
  %v304 = vmul.f32 %v290, %v279
  %v305 = vmul.f32 %v290, %v280
  %v306 = vmul.f32 %v290, %v281
  %v307 = vmul.f32 %v290, %v282
  %v308 = vsub.f32 1.0, %v51
  %v309 = vld [vmem:[%s3] sm:$0xf]
  %v310 = vld [vmem:[%s3 + $0x4] sm:$0xf]
  %v311 = vld [vmem:[%s3 + $0x8] sm:$0xf]
  %v312 = vld [vmem:[%s3 + $0xc] sm:$0xf]
  %v313 = vld [vmem:[%s3 + $0x10] sm:$0xf]
  %v314 = vld [vmem:[%s3 + $0x14] sm:$0xf]
  %v315 = vld [vmem:[%s3 + $0x18] sm:$0xf]
  %v316 = vld [vmem:[%s3 + $0x1c] sm:$0xf]
  %v317 = vld [vmem:[%s3 + $0x20] sm:$0xf]
  %v318 = vld [vmem:[%s3 + $0x24] sm:$0xf]
  %v319 = vld [vmem:[%s3 + $0x28] sm:$0xf]
  %v320 = vld [vmem:[%s3 + $0x2c] sm:$0xf]
  %v321 = vld [vmem:[%s3 + $0x30] sm:$0xf]
  %v322 = vld [vmem:[%s3 + $0x34] sm:$0xf]
  %v323 = vld [vmem:[%s3 + $0x38] sm:$0xf]
  %v324 = vld [vmem:[%s3 + $0x3c] sm:$0xf]
  %v341 = vunpack.c.l.b16 %v309
  %v342 = vunpack.c.l.b16 %v310
  %v343 = vunpack.c.l.b16 %v311
  %v344 = vunpack.c.l.b16 %v312
  %v345 = vunpack.c.l.b16 %v313
  %v346 = vunpack.c.l.b16 %v314
  %v347 = vunpack.c.l.b16 %v315
  %v348 = vunpack.c.l.b16 %v316
  %v349 = vunpack.c.l.b16 %v317
  %v350 = vunpack.c.l.b16 %v318
  %v351 = vunpack.c.l.b16 %v319
  %v352 = vunpack.c.l.b16 %v320
  %v353 = vunpack.c.l.b16 %v321
  %v354 = vunpack.c.l.b16 %v322
  %v355 = vunpack.c.l.b16 %v323
  %v356 = vunpack.c.l.b16 %v324
  %v357 = vpack.c.b16 %v342, %v341
  %v358 = vpack.c.b16 %v344, %v343
  %v359 = vpack.c.b16 %v346, %v345
  %v360 = vpack.c.b16 %v348, %v347
  %v361 = vpack.c.b16 %v350, %v349
  %v362 = vpack.c.b16 %v352, %v351
  %v363 = vpack.c.b16 %v354, %v353
  %v364 = vpack.c.b16 %v356, %v355
  %373 = vmatprep.subr.bf16.mxu0 0
  %374 = vmatpush1.bf16.msra.mxu0 %v157
  %375 = vmatprep.subr.bf16.mxu0 0
  %376 = vmatpush1.bf16.msra.mxu0 %v156
  %377 = vmatprep.subr.bf16.mxu0 0
  %378 = vmatpush1.bf16.msra.mxu0 %v155
  %379 = vmatprep.subr.bf16.mxu0 0
  %380 = vmatpush1.bf16.msra.mxu0 %v154
  %381 = vmatprep.subr.bf16.mxu0 0
  %382 = vmatpush1.bf16.msra.mxu0 %v153
  %383 = vmatprep.subr.bf16.mxu0 0
  %384 = vmatpush1.bf16.msra.mxu0 %v152
  %385 = vmatprep.subr.bf16.mxu0 0
  %386 = vmatpush1.bf16.msra.mxu0 %v151
  %387 = vmatprep.subr.bf16.mxu0 0
  %388 = vmatpush1.bf16.msra.mxu0 %v150
  %389 = vmatprep.subr.bf16.mxu0 0
  %390 = vmatpush2.bf16.msra.mxu0 0
  %391 = vmatprep.subr.bf16.mxu0 0
  %392 = vmatpush2.bf16.msra.mxu0 0
  %393 = vmatprep.subr.bf16.mxu0 0
  %394 = vmatpush2.bf16.msra.mxu0 0
  %395 = vmatprep.subr.bf16.mxu0 0
  %396 = vmatpush2.bf16.msra.mxu0 0
  %397 = vmatprep.subr.bf16.mxu0 0
  %398 = vmatpush2.bf16.msra.mxu0 0
  %399 = vmatprep.subr.bf16.mxu0 0
  %400 = vmatpush2.bf16.msra.mxu0 0
  %401 = vmatprep.subr.bf16.mxu0 0
  %402 = vmatpush2.bf16.msra.mxu0 0
  %403 = vmatprep.subr.bf16.mxu0 0
  %404 = vmatpush2.bf16.msra.mxu0 0
  %405 = vmatprep.mubr.bf16.mxu0 0
  %406 = vmatmul.mubr.bf16.gmra.mxu0 %v357
  %v407 = vpop.f32.mrf.mxu0
  %v408 = vadd.f32 0.0, %v407
  %v409 = vpop.f32.mrf.mxu0
  %v410 = vpop.f32.mrf.mxu0
  %v411 = vadd.f32 0.0, %v410
  %v412 = vpop.f32.mrf.mxu0
  %413 = vmatprep.mubr.bf16.mxu0 0
  %414 = vmatmul.mubr.bf16.gmra.mxu0 %v358
  %v415 = vpop.f32.mrf.mxu0
  %v416 = vadd.f32 0.0, %v415
  %v417 = vpop.f32.mrf.mxu0
  %v418 = vpop.f32.mrf.mxu0
  %v419 = vadd.f32 0.0, %v418
  %v420 = vpop.f32.mrf.mxu0
  %421 = vmatprep.mubr.bf16.mxu0 0
  %422 = vmatmul.mubr.bf16.gmra.mxu0 %v359
  %v423 = vpop.f32.mrf.mxu0
  %v424 = vadd.f32 0.0, %v423
  %v425 = vpop.f32.mrf.mxu0
  %v426 = vpop.f32.mrf.mxu0
  %v427 = vadd.f32 0.0, %v426
  %v428 = vpop.f32.mrf.mxu0
  %429 = vmatprep.mubr.bf16.mxu0 0
  %430 = vmatmul.mubr.bf16.gmra.mxu0 %v360
  %v431 = vpop.f32.mrf.mxu0
  %v432 = vadd.f32 0.0, %v431
  %v433 = vpop.f32.mrf.mxu0
  %v434 = vpop.f32.mrf.mxu0
  %v435 = vadd.f32 0.0, %v434
  %v436 = vpop.f32.mrf.mxu0
  %437 = vmatprep.mubr.bf16.mxu0 0
  %438 = vmatmul.mubr.bf16.gmra.mxu0 %v361
  %v439 = vpop.f32.mrf.mxu0
  %v440 = vadd.f32 0.0, %v439
  %v441 = vpop.f32.mrf.mxu0
  %v442 = vpop.f32.mrf.mxu0
  %v443 = vadd.f32 0.0, %v442
  %v444 = vpop.f32.mrf.mxu0
  %445 = vmatprep.mubr.bf16.mxu0 0
  %446 = vmatmul.mubr.bf16.gmra.mxu0 %v362
  %v447 = vpop.f32.mrf.mxu0
  %v448 = vadd.f32 0.0, %v447
  %v449 = vpop.f32.mrf.mxu0
  %v450 = vpop.f32.mrf.mxu0
  %v451 = vadd.f32 0.0, %v450
  %v452 = vpop.f32.mrf.mxu0
  %453 = vmatprep.mubr.bf16.mxu0 0
  %454 = vmatmul.mubr.bf16.gmra.mxu0 %v363
  %v455 = vpop.f32.mrf.mxu0
  %v456 = vadd.f32 0.0, %v455
  %v457 = vpop.f32.mrf.mxu0
  %v458 = vpop.f32.mrf.mxu0
  %v459 = vadd.f32 0.0, %v458
  %v460 = vpop.f32.mrf.mxu0
  %461 = vmatprep.mubr.bf16.mxu0 0
  %462 = vmatmul.mubr.bf16.gmra.mxu0 %v364
  %v463 = vpop.f32.mrf.mxu0
  %v464 = vadd.f32 0.0, %v463
  %v465 = vpop.f32.mrf.mxu0
  %v466 = vpop.f32.mrf.mxu0
  %v467 = vadd.f32 0.0, %v466
  %v468 = vpop.f32.mrf.mxu0
  %469 = vdwg.mxu0
  %vm470 = vcmp.ge.s32.totalorder %v53, 32
  %vm471 = vcmp.lt.s32.totalorder %v53, 64
  %vm472 = vmand %vm470, %vm471
  %v473 = vsel %vm472, 1.0, 0.0
  %v474 = vmul.f32 %v408, %v473
  %v475 = vmul.f32 %v411, %v473
  %v476 = vmul.f32 %v416, %v473
  %v477 = vmul.f32 %v419, %v473
  %v478 = vmul.f32 %v424, %v473
  %v479 = vmul.f32 %v427, %v473
  %v480 = vmul.f32 %v432, %v473
  %v481 = vmul.f32 %v435, %v473
  %v482 = vmul.f32 %v440, %v473
  %v483 = vmul.f32 %v443, %v473
  %v484 = vmul.f32 %v448, %v473
  %v485 = vmul.f32 %v451, %v473
  %v486 = vmul.f32 %v456, %v473
  %v487 = vmul.f32 %v459, %v473
  %v488 = vmul.f32 %v464, %v473
  %v489 = vmul.f32 %v467, %v473
  %v490 = vld [vmem:[%s4] sm:$0xf]
  %v491 = vld [vmem:[%s4 + $0x4] sm:$0xf]
  %v492 = vld [vmem:[%s4 + $0x8] sm:$0xf]
  %v493 = vld [vmem:[%s4 + $0xc] sm:$0xf]
  %v494 = vld [vmem:[%s4 + $0x10] sm:$0xf]
  %v495 = vld [vmem:[%s4 + $0x14] sm:$0xf]
  %v496 = vld [vmem:[%s4 + $0x18] sm:$0xf]
  %v497 = vld [vmem:[%s4 + $0x1c] sm:$0xf]
  %v498 = vld [vmem:[%s4 + $0x20] sm:$0xf]
  %v499 = vld [vmem:[%s4 + $0x24] sm:$0xf]
  %v500 = vld [vmem:[%s4 + $0x28] sm:$0xf]
  %v501 = vld [vmem:[%s4 + $0x2c] sm:$0xf]
  %v502 = vld [vmem:[%s4 + $0x30] sm:$0xf]
  %v503 = vld [vmem:[%s4 + $0x34] sm:$0xf]
  %v504 = vld [vmem:[%s4 + $0x38] sm:$0xf]
  %v505 = vld [vmem:[%s4 + $0x3c] sm:$0xf]
  %v522 = vunpack.c.l.b16 %v490
  %v523 = vunpack.c.l.b16 %v491
  %v524 = vunpack.c.l.b16 %v492
  %v525 = vunpack.c.l.b16 %v493
  %v526 = vunpack.c.l.b16 %v494
  %v527 = vunpack.c.l.b16 %v495
  %v528 = vunpack.c.l.b16 %v496
  %v529 = vunpack.c.l.b16 %v497
  %v530 = vunpack.c.l.b16 %v498
  %v531 = vunpack.c.l.b16 %v499
  %v532 = vunpack.c.l.b16 %v500
  %v533 = vunpack.c.l.b16 %v501
  %v534 = vunpack.c.l.b16 %v502
  %v535 = vunpack.c.l.b16 %v503
  %v536 = vunpack.c.l.b16 %v504
  %v537 = vunpack.c.l.b16 %v505
  %v538 = vpack.c.b16 %v523, %v522
  %v539 = vpack.c.b16 %v525, %v524
  %v540 = vpack.c.b16 %v527, %v526
  %v541 = vpack.c.b16 %v529, %v528
  %v542 = vpack.c.b16 %v531, %v530
  %v543 = vpack.c.b16 %v533, %v532
  %v544 = vpack.c.b16 %v535, %v534
  %v545 = vpack.c.b16 %v537, %v536
  %554 = vmatprep.subr.bf16.mxu0 0
  %555 = vmatpush1.bf16.msra.mxu0 %v157
  %556 = vmatprep.subr.bf16.mxu0 0
  %557 = vmatpush1.bf16.msra.mxu0 %v156
  %558 = vmatprep.subr.bf16.mxu0 0
  %559 = vmatpush1.bf16.msra.mxu0 %v155
  %560 = vmatprep.subr.bf16.mxu0 0
  %561 = vmatpush1.bf16.msra.mxu0 %v154
  %562 = vmatprep.subr.bf16.mxu0 0
  %563 = vmatpush1.bf16.msra.mxu0 %v153
  %564 = vmatprep.subr.bf16.mxu0 0
  %565 = vmatpush1.bf16.msra.mxu0 %v152
  %566 = vmatprep.subr.bf16.mxu0 0
  %567 = vmatpush1.bf16.msra.mxu0 %v151
  %568 = vmatprep.subr.bf16.mxu0 0
  %569 = vmatpush1.bf16.msra.mxu0 %v150
  %570 = vmatprep.subr.bf16.mxu0 0
  %571 = vmatpush2.bf16.msra.mxu0 0
  %572 = vmatprep.subr.bf16.mxu0 0
  %573 = vmatpush2.bf16.msra.mxu0 0
  %574 = vmatprep.subr.bf16.mxu0 0
  %575 = vmatpush2.bf16.msra.mxu0 0
  %576 = vmatprep.subr.bf16.mxu0 0
  %577 = vmatpush2.bf16.msra.mxu0 0
  %578 = vmatprep.subr.bf16.mxu0 0
  %579 = vmatpush2.bf16.msra.mxu0 0
  %580 = vmatprep.subr.bf16.mxu0 0
  %581 = vmatpush2.bf16.msra.mxu0 0
  %582 = vmatprep.subr.bf16.mxu0 0
  %583 = vmatpush2.bf16.msra.mxu0 0
  %584 = vmatprep.subr.bf16.mxu0 0
  %585 = vmatpush2.bf16.msra.mxu0 0
  %586 = vmatprep.mubr.bf16.mxu0 0
  %587 = vmatmul.mubr.bf16.gmra.mxu0 %v538
  %v588 = vpop.f32.mrf.mxu0
  %v589 = vadd.f32 0.0, %v588
  %v590 = vpop.f32.mrf.mxu0
  %v591 = vpop.f32.mrf.mxu0
  %v592 = vadd.f32 0.0, %v591
  %v593 = vpop.f32.mrf.mxu0
  %594 = vmatprep.mubr.bf16.mxu0 0
  %595 = vmatmul.mubr.bf16.gmra.mxu0 %v539
  %v596 = vpop.f32.mrf.mxu0
  %v597 = vadd.f32 0.0, %v596
  %v598 = vpop.f32.mrf.mxu0
  %v599 = vpop.f32.mrf.mxu0
  %v600 = vadd.f32 0.0, %v599
  %v601 = vpop.f32.mrf.mxu0
  %602 = vmatprep.mubr.bf16.mxu0 0
  %603 = vmatmul.mubr.bf16.gmra.mxu0 %v540
  %v604 = vpop.f32.mrf.mxu0
  %v605 = vadd.f32 0.0, %v604
  %v606 = vpop.f32.mrf.mxu0
  %v607 = vpop.f32.mrf.mxu0
  %v608 = vadd.f32 0.0, %v607
  %v609 = vpop.f32.mrf.mxu0
  %610 = vmatprep.mubr.bf16.mxu0 0
  %611 = vmatmul.mubr.bf16.gmra.mxu0 %v541
  %v612 = vpop.f32.mrf.mxu0
  %v613 = vadd.f32 0.0, %v612
  %v614 = vpop.f32.mrf.mxu0
  %v615 = vpop.f32.mrf.mxu0
  %v616 = vadd.f32 0.0, %v615
  %v617 = vpop.f32.mrf.mxu0
  %618 = vmatprep.mubr.bf16.mxu0 0
  %619 = vmatmul.mubr.bf16.gmra.mxu0 %v542
  %v620 = vpop.f32.mrf.mxu0
  %v621 = vadd.f32 0.0, %v620
  %v622 = vpop.f32.mrf.mxu0
  %v623 = vpop.f32.mrf.mxu0
  %v624 = vadd.f32 0.0, %v623
  %v625 = vpop.f32.mrf.mxu0
  %626 = vmatprep.mubr.bf16.mxu0 0
  %627 = vmatmul.mubr.bf16.gmra.mxu0 %v543
  %v628 = vpop.f32.mrf.mxu0
  %v629 = vadd.f32 0.0, %v628
  %v630 = vpop.f32.mrf.mxu0
  %v631 = vpop.f32.mrf.mxu0
  %v632 = vadd.f32 0.0, %v631
  %v633 = vpop.f32.mrf.mxu0
  %634 = vmatprep.mubr.bf16.mxu0 0
  %635 = vmatmul.mubr.bf16.gmra.mxu0 %v544
  %v636 = vpop.f32.mrf.mxu0
  %v637 = vadd.f32 0.0, %v636
  %v638 = vpop.f32.mrf.mxu0
  %v639 = vpop.f32.mrf.mxu0
  %v640 = vadd.f32 0.0, %v639
  %v641 = vpop.f32.mrf.mxu0
  %642 = vmatprep.mubr.bf16.mxu0 0
  %643 = vmatmul.mubr.bf16.gmra.mxu0 %v545
  %v644 = vpop.f32.mrf.mxu0
  %v645 = vadd.f32 0.0, %v644
  %v646 = vpop.f32.mrf.mxu0
  %v647 = vpop.f32.mrf.mxu0
  %v648 = vadd.f32 0.0, %v647
  %v649 = vpop.f32.mrf.mxu0
  %650 = vdwg.mxu0
  %vm651 = vcmp.ge.s32.totalorder %v53, 64
  %vm652 = vcmp.lt.s32.totalorder %v53, 96
  %vm653 = vmand %vm651, %vm652
  %v654 = vsel %vm653, 1.0, 0.0
  %v655 = vmul.f32 %v589, %v654
  %v656 = vmul.f32 %v592, %v654
  %v657 = vmul.f32 %v597, %v654
  %v658 = vmul.f32 %v600, %v654
  %v659 = vmul.f32 %v605, %v654
  %v660 = vmul.f32 %v608, %v654
  %v661 = vmul.f32 %v613, %v654
  %v662 = vmul.f32 %v616, %v654
  %v663 = vmul.f32 %v621, %v654
  %v664 = vmul.f32 %v624, %v654
  %v665 = vmul.f32 %v629, %v654
  %v666 = vmul.f32 %v632, %v654
  %v667 = vmul.f32 %v637, %v654
  %v668 = vmul.f32 %v640, %v654
  %v669 = vmul.f32 %v645, %v654
  %v670 = vmul.f32 %v648, %v654
  %v671 = vadd.f32 %v474, %v655
  %v672 = vadd.f32 %v475, %v656
  %v673 = vadd.f32 %v476, %v657
  %v674 = vadd.f32 %v477, %v658
  %v675 = vadd.f32 %v478, %v659
  %v676 = vadd.f32 %v479, %v660
  %v677 = vadd.f32 %v480, %v661
  %v678 = vadd.f32 %v481, %v662
  %v679 = vadd.f32 %v482, %v663
  %v680 = vadd.f32 %v483, %v664
  %v681 = vadd.f32 %v484, %v665
  %v682 = vadd.f32 %v485, %v666
  %v683 = vadd.f32 %v486, %v667
  %v684 = vadd.f32 %v487, %v668
  %v685 = vadd.f32 %v488, %v669
  %v686 = vadd.f32 %v489, %v670
  %v688 = vlaneseq
  %v689 = vshrl.u32 %v688, 7
  %v690 = vsub.s32 0, %v689
  %v691 = vrot.slane %v308, %v690
  %692 = vset.pattern.permute.xlu0 0
  %693 = vperm.xlu0 %692, %v691
  %v694 = vpop.permute.xlu0 %693
  %v696 = vmul.f32 %v694, %v671
  %v697 = vmul.f32 %v694, %v672
  %v698 = vmul.f32 %v694, %v673
  %v699 = vmul.f32 %v694, %v674
  %v700 = vmul.f32 %v694, %v675
  %v701 = vmul.f32 %v694, %v676
  %v702 = vmul.f32 %v694, %v677
  %v703 = vmul.f32 %v694, %v678
  %v704 = vmul.f32 %v694, %v679
  %v705 = vmul.f32 %v694, %v680
  %v706 = vmul.f32 %v694, %v681
  %v707 = vmul.f32 %v694, %v682
  %v708 = vmul.f32 %v694, %v683
  %v709 = vmul.f32 %v694, %v684
  %v710 = vmul.f32 %v694, %v685
  %v711 = vmul.f32 %v694, %v686
  %v712 = vadd.f32 %v292, %v696
  %v713 = vadd.f32 %v293, %v697
  %v714 = vadd.f32 %v294, %v698
  %v715 = vadd.f32 %v295, %v699
  %v716 = vadd.f32 %v296, %v700
  %v717 = vadd.f32 %v297, %v701
  %v718 = vadd.f32 %v298, %v702
  %v719 = vadd.f32 %v299, %v703
  %v720 = vadd.f32 %v300, %v704
  %v721 = vadd.f32 %v301, %v705
  %v722 = vadd.f32 %v302, %v706
  %v723 = vadd.f32 %v303, %v707
  %v724 = vadd.f32 %v304, %v708
  %v725 = vadd.f32 %v305, %v709
  %v726 = vadd.f32 %v306, %v710
  %v727 = vadd.f32 %v307, %v711
  %v728 = vld [vmem:[%s6] sm:$0x1]
  %729 = vset.pattern.permute.xlu0 0
  %730 = vperm.xlu0 %729, %v51
  %v731 = vpop.permute.xlu0 %730
  %v733 = vlaneseq
  %v734 = vshrl.u32 %v733, 7
  %v735 = vsub.s32 0, %v734
  %v736 = vrot.slane %v731, %v735
  %v737 = vmul.f32 %v736, %v728
  %v738 = vld [vmem:[%s7] sm:$0x1]
  %v739 = vld [vmem:[%s8] sm:$0x1]
  %v740 = vadd.f32 %v738, %v739
  %741 = vset.pattern.permute.xlu0 0
  %742 = vperm.xlu0 %741, %v308
  %v743 = vpop.permute.xlu0 %742
  %v745 = vlaneseq
  %v746 = vshrl.u32 %v745, 7
  %v747 = vsub.s32 0, %v746
  %v748 = vrot.slane %v743, %v747
  %v749 = vmul.f32 %v748, %v740
  %v750 = vadd.f32 %v737, %v749
  %v751 = vld [vmem:[%s5] sm:$0xff]
  %v752 = vld [vmem:[%s5 + $0x8] sm:$0xff]
  %v753 = vld [vmem:[%s5 + $0x10] sm:$0xff]
  %v754 = vld [vmem:[%s5 + $0x18] sm:$0xff]
  %v755 = vld [vmem:[%s5 + $0x20] sm:$0xff]
  %v756 = vld [vmem:[%s5 + $0x28] sm:$0xff]
  %v757 = vld [vmem:[%s5 + $0x30] sm:$0xff]
  %v758 = vld [vmem:[%s5 + $0x38] sm:$0xff]
  %v759 = vld [vmem:[%s5 + $0x40] sm:$0xff]
  %v760 = vld [vmem:[%s5 + $0x48] sm:$0xff]
  %v761 = vld [vmem:[%s5 + $0x50] sm:$0xff]
  %v762 = vld [vmem:[%s5 + $0x58] sm:$0xff]
  %v763 = vld [vmem:[%s5 + $0x60] sm:$0xff]
  %v764 = vld [vmem:[%s5 + $0x68] sm:$0xff]
  %v765 = vld [vmem:[%s5 + $0x70] sm:$0xff]
  %v766 = vld [vmem:[%s5 + $0x78] sm:$0xff]
  %v768 = vlaneseq
  %v769 = vshrl.u32 %v768, 7
  %v770 = vsub.s32 0, %v769
  %v771 = vrot.slane %v750, %v770
  %773 = vmatprep.subr.mxu0 0.0
  %774 = vmatpush1.msra.mxu0 %v766
  %775 = vmatprep.subr.mxu0 0.0
  %776 = vmatpush1.msra.mxu0 %v765
  %777 = vmatprep.subr.mxu0 0.0
  %778 = vmatpush1.msra.mxu0 %v764
  %779 = vmatprep.subr.mxu0 0.0
  %780 = vmatpush1.msra.mxu0 %v763
  %781 = vmatprep.subr.mxu0 0.0
  %782 = vmatpush1.msra.mxu0 %v762
  %783 = vmatprep.subr.mxu0 0.0
  %784 = vmatpush1.msra.mxu0 %v761
  %785 = vmatprep.subr.mxu0 0.0
  %786 = vmatpush1.msra.mxu0 %v760
  %787 = vmatprep.subr.mxu0 0.0
  %788 = vmatpush1.msra.mxu0 %v759
  %789 = vmatprep.subr.mxu0 0.0
  %790 = vmatpush1.msra.mxu0 %v758
  %791 = vmatprep.subr.mxu0 0.0
  %792 = vmatpush1.msra.mxu0 %v757
  %793 = vmatprep.subr.mxu0 0.0
  %794 = vmatpush1.msra.mxu0 %v756
  %795 = vmatprep.subr.mxu0 0.0
  %796 = vmatpush1.msra.mxu0 %v755
  %797 = vmatprep.subr.mxu0 0.0
  %798 = vmatpush1.msra.mxu0 %v754
  %799 = vmatprep.subr.mxu0 0.0
  %800 = vmatpush1.msra.mxu0 %v753
  %801 = vmatprep.subr.mxu0 0.0
  %802 = vmatpush1.msra.mxu0 %v752
  %803 = vmatprep.subr.mxu0 0.0
  %804 = vmatpush1.msra.mxu0 %v751
  %805 = vmatprep.subr.mxu0 0.0
  %806 = vmatpush2.msra.mxu0 0.0
  %807 = vmatprep.subr.mxu0 0.0
  %808 = vmatpush2.msra.mxu0 0.0
  %809 = vmatprep.subr.mxu0 0.0
  %810 = vmatpush2.msra.mxu0 0.0
  %811 = vmatprep.subr.mxu0 0.0
  %812 = vmatpush2.msra.mxu0 0.0
  %813 = vmatprep.subr.mxu0 0.0
  %814 = vmatpush2.msra.mxu0 0.0
  %815 = vmatprep.subr.mxu0 0.0
  %816 = vmatpush2.msra.mxu0 0.0
  %817 = vmatprep.subr.mxu0 0.0
  %818 = vmatpush2.msra.mxu0 0.0
  %819 = vmatprep.subr.mxu0 0.0
  %820 = vmatpush2.msra.mxu0 0.0
  %821 = vmatprep.subr.mxu0 0.0
  %822 = vmatpush2.msra.mxu0 0.0
  %823 = vmatprep.subr.mxu0 0.0
  %824 = vmatpush2.msra.mxu0 0.0
  %825 = vmatprep.subr.mxu0 0.0
  %826 = vmatpush2.msra.mxu0 0.0
  %827 = vmatprep.subr.mxu0 0.0
  %828 = vmatpush2.msra.mxu0 0.0
  %829 = vmatprep.subr.mxu0 0.0
  %830 = vmatpush2.msra.mxu0 0.0
  %831 = vmatprep.subr.mxu0 0.0
  %832 = vmatpush2.msra.mxu0 0.0
  %833 = vmatprep.subr.mxu0 0.0
  %834 = vmatpush2.msra.mxu0 0.0
  %835 = vmatprep.subr.mxu0 0.0
  %836 = vmatpush2.msra.mxu0 0.0
  %837 = vmatprep.mubr.f32.mxu0 0.0
  %838 = vmatmul.mubr.f32.gmra.mxu0 %v712
  %v839 = vpop.f32.mrf.mxu0
  %v840 = vadd.f32 %v771, %v839
  %v841 = vpop.f32.mrf.mxu0
  %842 = vmatprep.mubr.f32.mxu0 0.0
  %843 = vmatmul.mubr.f32.gmra.mxu0 %v713
  %v844 = vpop.f32.mrf.mxu0
  %v845 = vadd.f32 %v771, %v844
  %v846 = vpop.f32.mrf.mxu0
  %847 = vmatprep.mubr.f32.mxu0 0.0
  %848 = vmatmul.mubr.f32.gmra.mxu0 %v714
  %v849 = vpop.f32.mrf.mxu0
  %v850 = vadd.f32 %v771, %v849
  %v851 = vpop.f32.mrf.mxu0
  %852 = vmatprep.mubr.f32.mxu0 0.0
  %853 = vmatmul.mubr.f32.gmra.mxu0 %v715
  %v854 = vpop.f32.mrf.mxu0
  %v855 = vadd.f32 %v771, %v854
  %v856 = vpop.f32.mrf.mxu0
  %857 = vmatprep.mubr.f32.mxu0 0.0
  %858 = vmatmul.mubr.f32.gmra.mxu0 %v716
  %v859 = vpop.f32.mrf.mxu0
  %v860 = vadd.f32 %v771, %v859
  %v861 = vpop.f32.mrf.mxu0
  %862 = vmatprep.mubr.f32.mxu0 0.0
  %863 = vmatmul.mubr.f32.gmra.mxu0 %v717
  %v864 = vpop.f32.mrf.mxu0
  %v865 = vadd.f32 %v771, %v864
  %v866 = vpop.f32.mrf.mxu0
  %867 = vmatprep.mubr.f32.mxu0 0.0
  %868 = vmatmul.mubr.f32.gmra.mxu0 %v718
  %v869 = vpop.f32.mrf.mxu0
  %v870 = vadd.f32 %v771, %v869
  %v871 = vpop.f32.mrf.mxu0
  %872 = vmatprep.mubr.f32.mxu0 0.0
  %873 = vmatmul.mubr.f32.gmra.mxu0 %v719
  %v874 = vpop.f32.mrf.mxu0
  %v875 = vadd.f32 %v771, %v874
  %v876 = vpop.f32.mrf.mxu0
  %877 = vmatprep.mubr.f32.mxu0 0.0
  %878 = vmatmul.mubr.f32.gmra.mxu0 %v720
  %v879 = vpop.f32.mrf.mxu0
  %v880 = vadd.f32 %v771, %v879
  %v881 = vpop.f32.mrf.mxu0
  %882 = vmatprep.mubr.f32.mxu0 0.0
  %883 = vmatmul.mubr.f32.gmra.mxu0 %v721
  %v884 = vpop.f32.mrf.mxu0
  %v885 = vadd.f32 %v771, %v884
  %v886 = vpop.f32.mrf.mxu0
  %887 = vmatprep.mubr.f32.mxu0 0.0
  %888 = vmatmul.mubr.f32.gmra.mxu0 %v722
  %v889 = vpop.f32.mrf.mxu0
  %v890 = vadd.f32 %v771, %v889
  %v891 = vpop.f32.mrf.mxu0
  %892 = vmatprep.mubr.f32.mxu0 0.0
  %893 = vmatmul.mubr.f32.gmra.mxu0 %v723
  %v894 = vpop.f32.mrf.mxu0
  %v895 = vadd.f32 %v771, %v894
  %v896 = vpop.f32.mrf.mxu0
  %897 = vmatprep.mubr.f32.mxu0 0.0
  %898 = vmatmul.mubr.f32.gmra.mxu0 %v724
  %v899 = vpop.f32.mrf.mxu0
  %v900 = vadd.f32 %v771, %v899
  %v901 = vpop.f32.mrf.mxu0
  %902 = vmatprep.mubr.f32.mxu0 0.0
  %903 = vmatmul.mubr.f32.gmra.mxu0 %v725
  %v904 = vpop.f32.mrf.mxu0
  %v905 = vadd.f32 %v771, %v904
  %v906 = vpop.f32.mrf.mxu0
  %907 = vmatprep.mubr.f32.mxu0 0.0
  %908 = vmatmul.mubr.f32.gmra.mxu0 %v726
  %v909 = vpop.f32.mrf.mxu0
  %v910 = vadd.f32 %v771, %v909
  %v911 = vpop.f32.mrf.mxu0
  %912 = vmatprep.mubr.f32.mxu0 0.0
  %913 = vmatmul.mubr.f32.gmra.mxu0 %v727
  %v914 = vpop.f32.mrf.mxu0
  %v915 = vadd.f32 %v771, %v914
  %v916 = vpop.f32.mrf.mxu0
  %917 = vdwg.mxu0
  %vm918 = vcmp.lt.s32.totalorder %v53, 8
  %v919 = vsel %vm918, 0.0, -1e+30
  %v920 = vadd.f32 %v840, %v919
  %v921 = vadd.f32 %v845, %v919
  %v922 = vadd.f32 %v850, %v919
  %v923 = vadd.f32 %v855, %v919
  %v924 = vadd.f32 %v860, %v919
  %v925 = vadd.f32 %v865, %v919
  %v926 = vadd.f32 %v870, %v919
  %v927 = vadd.f32 %v875, %v919
  %v928 = vadd.f32 %v880, %v919
  %v929 = vadd.f32 %v885, %v919
  %v930 = vadd.f32 %v890, %v919
  %v931 = vadd.f32 %v895, %v919
  %v932 = vadd.f32 %v900, %v919
  %v933 = vadd.f32 %v905, %v919
  %v934 = vadd.f32 %v910, %v919
  %v935 = vadd.f32 %v915, %v919
  %936 = vmax.xlane.f32.xlu0 %v920
  %v937 = vpop.xlane.xlu0 %936
  %938 = vmax.xlane.f32.xlu0 %v921
  %v939 = vpop.xlane.xlu0 %938
  %940 = vmax.xlane.f32.xlu0 %v922
  %v941 = vpop.xlane.xlu0 %940
  %942 = vmax.xlane.f32.xlu0 %v923
  %v943 = vpop.xlane.xlu0 %942
  %944 = vmax.xlane.f32.xlu0 %v924
  %v945 = vpop.xlane.xlu0 %944
  %946 = vmax.xlane.f32.xlu0 %v925
  %v947 = vpop.xlane.xlu0 %946
  %948 = vmax.xlane.f32.xlu0 %v926
  %v949 = vpop.xlane.xlu0 %948
  %950 = vmax.xlane.f32.xlu0 %v927
  %v951 = vpop.xlane.xlu0 %950
  %952 = vmax.xlane.f32.xlu0 %v928
  %v953 = vpop.xlane.xlu0 %952
  %954 = vmax.xlane.f32.xlu0 %v929
  %v955 = vpop.xlane.xlu0 %954
  %956 = vmax.xlane.f32.xlu0 %v930
  %v957 = vpop.xlane.xlu0 %956
  %958 = vmax.xlane.f32.xlu0 %v931
  %v959 = vpop.xlane.xlu0 %958
  %960 = vmax.xlane.f32.xlu0 %v932
  %v961 = vpop.xlane.xlu0 %960
  %962 = vmax.xlane.f32.xlu0 %v933
  %v963 = vpop.xlane.xlu0 %962
  %964 = vmax.xlane.f32.xlu0 %v934
  %v965 = vpop.xlane.xlu0 %964
  %966 = vmax.xlane.f32.xlu0 %v935
  %v967 = vpop.xlane.xlu0 %966
  %v968 = vsub.f32 %v920, %v937
  %v969 = vsub.f32 %v921, %v939
  %v970 = vsub.f32 %v922, %v941
  %v971 = vsub.f32 %v923, %v943
  %v972 = vsub.f32 %v924, %v945
  %v973 = vsub.f32 %v925, %v947
  %v974 = vsub.f32 %v926, %v949
  %v975 = vsub.f32 %v927, %v951
  %v976 = vsub.f32 %v928, %v953
  %v977 = vsub.f32 %v929, %v955
  %v978 = vsub.f32 %v930, %v957
  %v979 = vsub.f32 %v931, %v959
  %v980 = vsub.f32 %v932, %v961
  %v981 = vsub.f32 %v933, %v963
  %v982 = vsub.f32 %v934, %v965
  %v983 = vsub.f32 %v935, %v967
  %v984 = vmul.f32 %v968, 1.442695
  %v985 = vpow.pop %v984
  %v986 = vmul.f32 %v969, 1.442695
  %v987 = vpow.pop %v986
  %v988 = vmul.f32 %v970, 1.442695
  %v989 = vpow.pop %v988
  %v990 = vmul.f32 %v971, 1.442695
  %v991 = vpow.pop %v990
  %v992 = vmul.f32 %v972, 1.442695
  %v993 = vpow.pop %v992
  %v994 = vmul.f32 %v973, 1.442695
  %v995 = vpow.pop %v994
  %v996 = vmul.f32 %v974, 1.442695
  %v997 = vpow.pop %v996
  %v998 = vmul.f32 %v975, 1.442695
  %v999 = vpow.pop %v998
  %v1000 = vmul.f32 %v976, 1.442695
  %v1001 = vpow.pop %v1000
  %v1002 = vmul.f32 %v977, 1.442695
  %v1003 = vpow.pop %v1002
  %v1004 = vmul.f32 %v978, 1.442695
  %v1005 = vpow.pop %v1004
  %v1006 = vmul.f32 %v979, 1.442695
  %v1007 = vpow.pop %v1006
  %v1008 = vmul.f32 %v980, 1.442695
  %v1009 = vpow.pop %v1008
  %v1010 = vmul.f32 %v981, 1.442695
  %v1011 = vpow.pop %v1010
  %v1012 = vmul.f32 %v982, 1.442695
  %v1013 = vpow.pop %v1012
  %v1014 = vmul.f32 %v983, 1.442695
  %v1015 = vpow.pop %v1014
  %1016 = vadd.xlane.f32.xlu0 %v985
  %v1017 = vpop.xlane.xlu0 %1016
  %1018 = vadd.xlane.f32.xlu0 %v987
  %v1019 = vpop.xlane.xlu0 %1018
  %1020 = vadd.xlane.f32.xlu0 %v989
  %v1021 = vpop.xlane.xlu0 %1020
  %1022 = vadd.xlane.f32.xlu0 %v991
  %v1023 = vpop.xlane.xlu0 %1022
  %1024 = vadd.xlane.f32.xlu0 %v993
  %v1025 = vpop.xlane.xlu0 %1024
  %1026 = vadd.xlane.f32.xlu0 %v995
  %v1027 = vpop.xlane.xlu0 %1026
  %1028 = vadd.xlane.f32.xlu0 %v997
  %v1029 = vpop.xlane.xlu0 %1028
  %1030 = vadd.xlane.f32.xlu0 %v999
  %v1031 = vpop.xlane.xlu0 %1030
  %1032 = vadd.xlane.f32.xlu0 %v1001
  %v1033 = vpop.xlane.xlu0 %1032
  %1034 = vadd.xlane.f32.xlu0 %v1003
  %v1035 = vpop.xlane.xlu0 %1034
  %1036 = vadd.xlane.f32.xlu0 %v1005
  %v1037 = vpop.xlane.xlu0 %1036
  %1038 = vadd.xlane.f32.xlu0 %v1007
  %v1039 = vpop.xlane.xlu0 %1038
  %1040 = vadd.xlane.f32.xlu0 %v1009
  %v1041 = vpop.xlane.xlu0 %1040
  %1042 = vadd.xlane.f32.xlu0 %v1011
  %v1043 = vpop.xlane.xlu0 %1042
  %1044 = vadd.xlane.f32.xlu0 %v1013
  %v1045 = vpop.xlane.xlu0 %1044
  %1046 = vadd.xlane.f32.xlu0 %v1015
  %v1047 = vpop.xlane.xlu0 %1046
  %v1048 = vlog2.pop %v1017
  %v1049 = vmul.f32 %v1048, 0.6931472
  %v1050 = vlog2.pop %v1019
  %v1051 = vmul.f32 %v1050, 0.6931472
  %v1052 = vlog2.pop %v1021
  %v1053 = vmul.f32 %v1052, 0.6931472
  %v1054 = vlog2.pop %v1023
  %v1055 = vmul.f32 %v1054, 0.6931472
  %v1056 = vlog2.pop %v1025
  %v1057 = vmul.f32 %v1056, 0.6931472
  %v1058 = vlog2.pop %v1027
  %v1059 = vmul.f32 %v1058, 0.6931472
  %v1060 = vlog2.pop %v1029
  %v1061 = vmul.f32 %v1060, 0.6931472
  %v1062 = vlog2.pop %v1031
  %v1063 = vmul.f32 %v1062, 0.6931472
  %v1064 = vlog2.pop %v1033
  %v1065 = vmul.f32 %v1064, 0.6931472
  %v1066 = vlog2.pop %v1035
  %v1067 = vmul.f32 %v1066, 0.6931472
  %v1068 = vlog2.pop %v1037
  %v1069 = vmul.f32 %v1068, 0.6931472
  %v1070 = vlog2.pop %v1039
  %v1071 = vmul.f32 %v1070, 0.6931472
  %v1072 = vlog2.pop %v1041
  %v1073 = vmul.f32 %v1072, 0.6931472
  %v1074 = vlog2.pop %v1043
  %v1075 = vmul.f32 %v1074, 0.6931472
  %v1076 = vlog2.pop %v1045
  %v1077 = vmul.f32 %v1076, 0.6931472
  %v1078 = vlog2.pop %v1047
  %v1079 = vmul.f32 %v1078, 0.6931472
  %v1080 = vsub.f32 %v968, %v1049
  %v1081 = vsub.f32 %v969, %v1051
  %v1082 = vsub.f32 %v970, %v1053
  %v1083 = vsub.f32 %v971, %v1055
  %v1084 = vsub.f32 %v972, %v1057
  %v1085 = vsub.f32 %v973, %v1059
  %v1086 = vsub.f32 %v974, %v1061
  %v1087 = vsub.f32 %v975, %v1063
  %v1088 = vsub.f32 %v976, %v1065
  %v1089 = vsub.f32 %v977, %v1067
  %v1090 = vsub.f32 %v978, %v1069
  %v1091 = vsub.f32 %v979, %v1071
  %v1092 = vsub.f32 %v980, %v1073
  %v1093 = vsub.f32 %v981, %v1075
  %v1094 = vsub.f32 %v982, %v1077
  %v1095 = vsub.f32 %v983, %v1079
  %1096 = vst [vmem:[%s9] sm:$0xff] %v1080
  %1097 = vst [vmem:[%s9 + $0x8] sm:$0xff] %v1081
  %1098 = vst [vmem:[%s9 + $0x10] sm:$0xff] %v1082
  %1099 = vst [vmem:[%s9 + $0x18] sm:$0xff] %v1083
  %1100 = vst [vmem:[%s9 + $0x20] sm:$0xff] %v1084
  %1101 = vst [vmem:[%s9 + $0x28] sm:$0xff] %v1085
  %1102 = vst [vmem:[%s9 + $0x30] sm:$0xff] %v1086
  %1103 = vst [vmem:[%s9 + $0x38] sm:$0xff] %v1087
  %1104 = vst [vmem:[%s9 + $0x40] sm:$0xff] %v1088
  %1105 = vst [vmem:[%s9 + $0x48] sm:$0xff] %v1089
  %1106 = vst [vmem:[%s9 + $0x50] sm:$0xff] %v1090
  %1107 = vst [vmem:[%s9 + $0x58] sm:$0xff] %v1091
  %1108 = vst [vmem:[%s9 + $0x60] sm:$0xff] %v1092
  %1109 = vst [vmem:[%s9 + $0x68] sm:$0xff] %v1093
  %1110 = vst [vmem:[%s9 + $0x70] sm:$0xff] %v1094
  %1111 = vst [vmem:[%s9 + $0x78] sm:$0xff] %v1095
  // Predicated region
  $region38: #{deepgcn_forward.5} parent=0 // pred_check
    _
  $region39: #{deepgcn_forward.5} parent=0 // pred_check_branch
    %1113 = sbr.rel (0) target = $region41
  $region40: #{deepgcn_forward.5} parent=0 // pred_region
    _
  $region41: #{deepgcn_forward.5} parent=0 // pred_fallthru
    _
  // Predicated region
  $region42: #{deepgcn_forward.5} parent=0 // pred_check
    _
  $region43: #{deepgcn_forward.5} parent=0 // pred_check_branch
    %1115 = sbr.rel (0) target = $region45
  $region44: #{deepgcn_forward.5} parent=0 // pred_region
    _
  $region45: #{deepgcn_forward.5} parent=0 // pred_fallthru
    _

</llo_original>
